<compile_context>
chip_gen: v5e
topology: v5e:2x2
jax: 0.10.0
libtpu: 0.0.40
codegen_flags: <defaults>
</compile_context>

<pallas_src>
import numpy as np
import jax
import jax.numpy as jnp
from jax.experimental import pallas as pl
from jax.experimental.pallas import tpu as pltpu

X_SIZE = 32     # node feature size
H_SIZE = 32     # logical tree-LSTM hidden size
OUT_SIZE = 8    # logical decoder output size

HP = 128        # lane-padded hidden slab (h/c/f*c live in lanes [0, H_SIZE))
OUTP = 128      # decoder output padded to lane width
SUB = 8
assert 3 * H_SIZE <= HP, "i/o/u gates must pack into one 128-lane slab"


def _round_up(v, m):
    return ((v + m - 1) // m) * m


# --------------------------------------------------------------------------
# Fused kernel: Child-Sum Tree-LSTM (bottom-up, static in-kernel level loop)
#               + root gather via SMEM indices + 2-layer MLP decoder.
# --------------------------------------------------------------------------
def _tree2tree_kernel(root_rows_ref,                       # SMEM (r_pad,) int32
                      x_ref, adj_ref,
                      w_iou_ref, u_iou_ref, b_iou_ref, u_f_ref, b_f_ref,
                      w1_ref, b1_ref, w2_ref, b2_ref,
                      h_out_ref, dec_ref,
                      h_bf, fc_bf):
    lw = x_ref.shape[0]                 # nodes per level block (static)
    n_pad, hp = h_out_ref.shape
    n_levels = n_pad // lw
    H = u_f_ref.shape[1]                # logical hidden size
    r_pad = dec_ref.shape[0]
    lane_pad = jnp.zeros((lw, hp - H), jnp.float32)   # hoisted (no per-level bcast)

    # Zero-init is load-bearing: internal levels matmul adj against ALL scratch
    # rows, and MXU 0 * stale-VMEM-NaN is still NaN.
    h_bf[...] = jnp.zeros_like(h_bf)
    fc_bf[...] = jnp.zeros_like(fc_bf)

    b_iou = b_iou_ref[...]

    def finish(level, iou, fc_sum, store_fc):
        # Gate-packed 128-lane slab: i at [0,H), o at [H,2H), u at [2H,3H).
        i_g = jax.nn.sigmoid(iou[:, 0:H])
        o_g = jax.nn.sigmoid(iou[:, H:2 * H])
        u_g = jnp.tanh(iou[:, 2 * H:3 * H])
        c = i_g * u_g + fc_sum                                   # (lw, H)
        h = jnp.concatenate([o_g * jnp.tanh(c), lane_pad], axis=1)   # lane-dense 128
        r0 = level * lw                                          # static offset
        h_out_ref[pl.ds(r0, lw), :] = h                          # g.ndata['h'] rows
        h_bf[pl.ds(r0, lw), :] = h.astype(jnp.bfloat16)          # MXU operand copy
        if store_fc:
            # Per-child forget contribution f_k * c_k, computed exactly once per
            # node and cached for its (future) parent level.  Skipped at the top
            # level: those rows would never be read.
            f = jax.nn.sigmoid(
                jnp.dot(h.astype(jnp.bfloat16), u_f_ref[...],
                        preferred_element_type=jnp.float32) + b_f_ref[...])   # (lw, H)
            fc = jnp.concatenate([f * c, lane_pad], axis=1)
            fc_bf[pl.ds(r0, lw), :] = fc.astype(jnp.bfloat16)

    # ---- Level 0: leaves.  x is leaf-only with the token mask folded in
    # host-side (W_iou is provably dead at every other level), and leaves have
    # no children, so the adjacency / U_iou / forget-sum matmuls are skipped.
    # NOTE: valid only while non-leaf nodes carry zero input features.
    wx = jnp.dot(x_ref[...].astype(jnp.bfloat16), w_iou_ref[...],
                 preferred_element_type=jnp.float32)
    finish(0, wx + b_iou, 0.0, store_fc=n_levels > 1)

    # ---- Levels 1 .. n_levels-1, bottom-up (static, tiny trip count).
    for level in range(1, n_levels):
        adj = adj_ref[pl.ds(level * lw, lw), :]                  # this level's rows
        h_sum = jnp.dot(adj, h_bf[...], preferred_element_type=jnp.float32)
        fc_sum = jnp.dot(adj, fc_bf[...], preferred_element_type=jnp.float32)
        iou = jnp.dot(h_sum.astype(jnp.bfloat16), u_iou_ref[...],
                      preferred_element_type=jnp.float32) + b_iou
        finish(level, iou, fc_sum[:, 0:H], store_fc=level < n_levels - 1)

    # ---- Root gather (g.ndata['h'][root_ids]) via SMEM row indices, then the
    # 2-layer MLP decoder — no dense one-hot selector matmul.
    encs = jnp.concatenate(
        [h_out_ref[pl.ds(root_rows_ref[r], 1), :] for r in range(r_pad)], axis=0)
    z = jnp.tanh(jnp.dot(encs.astype(jnp.bfloat16), w1_ref[...],
                         preferred_element_type=jnp.float32) + b1_ref[...])
    dec_ref[...] = (jnp.dot(z.astype(jnp.bfloat16), w2_ref[...],
                            preferred_element_type=jnp.float32) + b2_ref[...])


def _tree2tree2_fused_call(root_rows, x_leaf, adj_p, enc_p, dec_p,
                           n_pad, lw, r_pad):
    full = lambda shape: pl.BlockSpec(shape, lambda i, rr: (0, 0))
    grid_spec = pltpu.PrefetchScalarGridSpec(
        num_scalar_prefetch=1,             # root row indices -> SMEM
        grid=(1,),                         # single step: levels loop in-kernel
        in_specs=[
            full((lw, X_SIZE)),            # x  (leaf rows only, token mask folded)
            full((n_pad, n_pad)),          # level-sorted adjacency (bf16 0/1, exact)
            full((X_SIZE, HP)),            # W_iou (gate-packed, bf16)
            full((HP, HP)),                # U_iou (gate-packed, bf16)
            full((1, HP)),                 # b_iou (f32)
            full((HP, H_SIZE)),            # U_f   (bf16)
            full((1, H_SIZE)),             # b_f   (f32)
            full((HP, HP)),                # decoder W1 (bf16)
            full((1, HP)),                 # decoder b1 (f32)
            full((HP, OUTP)),              # decoder W2 (bf16)
            full((1, OUTP)),               # decoder b2 (f32)
        ],
        out_specs=(
            full((n_pad, HP)),             # full h (g.ndata['h']), lane-dense f32
            full((r_pad, OUTP)),           # decoder output, lane-dense f32
        ),
        scratch_shapes=[pltpu.VMEM((n_pad, HP), jnp.bfloat16),   # h (MXU operand)
                        pltpu.VMEM((n_pad, HP), jnp.bfloat16)],  # cached f*c
    )
    return pl.pallas_call(
        _tree2tree_kernel,
        out_shape=(jax.ShapeDtypeStruct((n_pad, HP), jnp.float32),
                   jax.ShapeDtypeStruct((r_pad, OUTP), jnp.float32)),
        grid_spec=grid_spec,
        compiler_params=pltpu.CompilerParams(
            dimension_semantics=("arbitrary",)),
    )(root_rows, x_leaf, adj_p,
      enc_p["w_iou"], enc_p["u_iou"], enc_p["b_iou"], enc_p["u_f"], enc_p["b_f"],
      dec_p["w1"], dec_p["b1"], dec_p["w2"], dec_p["b2"])


# --------------------------------------------------------------------------
# Graph preprocessing (host side, static): level-sort + pad node ordering.
# --------------------------------------------------------------------------
def build_forest():
    """Two trees batched DGL-style; edges are child -> parent."""
    edges = [(1, 0), (2, 0), (3, 1), (4, 1), (5, 2), (6, 2),
             (8, 7), (9, 7), (10, 8), (11, 8), (12, 8),
             (13, 9), (14, 9), (15, 9)]
    n = 16
    children = {i: [] for i in range(n)}
    has_parent = np.zeros((n,), bool)
    for c, p in edges:
        children[p].append(c)
        has_parent[c] = True
    roots = [i for i in range(n) if not has_parent[i]]     # out_degree == 0

    level = np.zeros((n,), np.int32)

    def _height(i):
        if children[i]:
            level[i] = 1 + max(_height(c) for c in children[i])
        return int(level[i])

    for r in roots:
        _height(r)
    n_levels = int(level.max()) + 1

    by_level = [[i for i in range(n) if level[i] == l] for l in range(n_levels)]
    lw = _round_up(max(len(b) for b in by_level), 16)      # 16: bf16 sublane tile
    n_pad = n_levels * lw
    new_idx = np.zeros((n,), np.int32)
    for l, nodes in enumerate(by_level):
        for j, i in enumerate(nodes):
            new_idx[i] = l * lw + j

    # Original-order dense structures (used only by the pure-JAX reference).
    adj = np.zeros((n, n), np.float32)             # adj[parent, child]
    adj_p = np.zeros((n_pad, n_pad), np.float32)   # level-sorted, padded
    for c, p in edges:
        adj[p, c] = 1.0
        adj_p[new_idx[p], new_idx[c]] = 1.0
    lvl_masks = np.zeros((n_levels, n, 1), np.float32)
    for i in range(n):
        lvl_masks[level[i], i, 0] = 1.0
    leaves = by_level[0]                           # all leaves are level 0
    tok = np.zeros((n, 1), np.float32)             # token/leaf mask (reference only)
    for i in leaves:
        tok[i, 0] = 1.0

    r_pad = _round_up(len(roots), SUB)
    root_rows = np.zeros((r_pad,), np.int32)       # root rows in level-sorted order
    for r, i in enumerate(roots):
        root_rows[r] = new_idx[i]

    return dict(n=n, n_pad=n_pad, lw=lw, n_levels=n_levels, r_pad=r_pad,
                roots=roots, leaves=leaves, new_idx=new_idx,
                adj=adj, lvl_masks=lvl_masks, tok=tok,
                adj_p=adj_p, root_rows=root_rows)


# --------------------------------------------------------------------------
# Parameters: logical (f32, H=32) + packed/padded bf16 views for the kernel.
# --------------------------------------------------------------------------
def init_params(key):
    ks = jax.random.split(key, 9)
    s = 0.1
    enc = {
        "w_iou": s * jax.random.normal(ks[0], (X_SIZE, 3 * H_SIZE), jnp.float32),
        "u_iou": s * jax.random.normal(ks[1], (H_SIZE, 3 * H_SIZE), jnp.float32),
        "b_iou": s * jax.random.normal(ks[2], (1, 3 * H_SIZE), jnp.float32),
        "u_f":   s * jax.random.normal(ks[3], (H_SIZE, H_SIZE), jnp.float32),
        "b_f":   s * jax.random.normal(ks[4], (1, H_SIZE), jnp.float32),
    }
    dec = {
        "w1": s * jax.random.normal(ks[5], (H_SIZE, H_SIZE), jnp.float32),
        "b1": s * jax.random.normal(ks[6], (1, H_SIZE), jnp.float32),
        "w2": s * jax.random.normal(ks[7], (H_SIZE, OUT_SIZE), jnp.float32),
        "b2": s * jax.random.normal(ks[8], (1, OUT_SIZE), jnp.float32),
    }
    return enc, dec


def _corner_pad(a, shape):
    out = np.zeros(shape, np.float32)
    a = np.asarray(a, np.float32)
    out[tuple(slice(0, s) for s in a.shape)] = a
    return out


def pad_params(enc, dec):
    # Gate-packed layout: the three i/o/u gates occupy the first 3*H_SIZE
    # columns of a single 128-lane slab (no per-gate 128-lane padding).
    enc_p = {
        "w_iou": jnp.asarray(_corner_pad(enc["w_iou"], (X_SIZE, HP)), jnp.bfloat16),
        "u_iou": jnp.asarray(_corner_pad(enc["u_iou"], (HP, HP)), jnp.bfloat16),
        "b_iou": jnp.asarray(_corner_pad(enc["b_iou"], (1, HP)), jnp.float32),
        "u_f":   jnp.asarray(_corner_pad(enc["u_f"], (HP, H_SIZE)), jnp.bfloat16),
        "b_f":   jnp.asarray(enc["b_f"], jnp.float32),
    }
    dec_p = {
        "w1": jnp.asarray(_corner_pad(dec["w1"], (HP, HP)), jnp.bfloat16),
        "b1": jnp.asarray(_corner_pad(dec["b1"], (1, HP)), jnp.float32),
        "w2": jnp.asarray(_corner_pad(dec["w2"], (HP, OUTP)), jnp.bfloat16),
        "b2": jnp.asarray(_corner_pad(dec["b2"], (1, OUTP)), jnp.float32),
    }
    return enc_p, dec_p


# --------------------------------------------------------------------------
# Tree2Tree2.forward equivalent.
# --------------------------------------------------------------------------
def tree2tree2_forward(graph, x_enc, enc_params, dec_params):
    n_pad, lw, r_pad = graph["n_pad"], graph["lw"], graph["r_pad"]
    new_idx = jnp.asarray(graph["new_idx"], jnp.int32)
    leaves = jnp.asarray(graph["leaves"], jnp.int32)
    # Token mask folded in host-side: only leaf nodes carry W_iou(x) input and
    # all leaves live in the level-0 rows [0, lw).
    x_leaf = (jnp.zeros((lw, X_SIZE), jnp.float32)
              .at[new_idx[leaves]].set(x_enc[leaves]))
    enc_p, dec_p = pad_params(enc_params, dec_params)

    h_full, dec_out = _tree2tree2_fused_call(
        jnp.asarray(graph["root_rows"], jnp.int32),
        x_leaf,
        jnp.asarray(graph["adj_p"], jnp.bfloat16),      # 0/1 -> exact in bf16
        enc_p, dec_p, n_pad, lw, r_pad)

    h_nodes = h_full[new_idx][:, :H_SIZE]               # g.ndata['h'] (orig order)
    out = dec_out[:len(graph["roots"]), :OUT_SIZE]      # decoder(encs)
    return out, h_nodes


# --------------------------------------------------------------------------
# Pure-JAX f32 reference (dense formulation) for validation.
# --------------------------------------------------------------------------
def reference_forward(x, tok_mask, adj, lvl_masks, root_ids, enc, dec):
    wx = (x @ enc["w_iou"]) * tok_mask
    h = jnp.zeros((x.shape[0], H_SIZE), jnp.float32)
    c = jnp.zeros_like(h)
    for l in range(lvl_masks.shape[0]):
        m = lvl_masks[l]
        h_sum = adj @ h
        f = jax.nn.sigmoid(h @ enc["u_f"] + enc["b_f"])
        fc = adj @ (f * c)
        iou = wx + h_sum @ enc["u_iou"] + enc["b_iou"]
        i_g = jax.nn.sigmoid(iou[:, :H_SIZE])
        o_g = jax.nn.sigmoid(iou[:, H_SIZE:2 * H_SIZE])
        u_g = jnp.tanh(iou[:, 2 * H_SIZE:])
        c_new = i_g * u_g + fc
        h_new = o_g * jnp.tanh(c_new)
        h = jnp.where(m > 0, h_new, h)
        c = jnp.where(m > 0, c_new, c)
    encs = h[jnp.asarray(root_ids, jnp.int32)]
    z = jnp.tanh(encs @ dec["w1"] + dec["b1"])
    return z @ dec["w2"] + dec["b2"], h


if __name__ == "__main__":
    key = jax.random.PRNGKey(0)
    k_x, k_p = jax.random.split(key)

    graph = build_forest()
    x_enc = jax.random.normal(k_x, (graph["n"], X_SIZE), jnp.float32)
    enc_params, dec_params = init_params(k_p)

    out, h_nodes = tree2tree2_forward(graph, x_enc, enc_params, dec_params)
    out = jax.block_until_ready(out)

    ref_out, ref_h = reference_forward(
        x_enc, jnp.asarray(graph["tok"]), jnp.asarray(graph["adj"]),
        jnp.asarray(graph["lvl_masks"]), graph["roots"], enc_params, dec_params)

    assert out.shape == (len(graph["roots"]), OUT_SIZE)
    assert bool(jnp.all(jnp.isfinite(out)))
    # bf16 MXU operands vs the f32 reference -> ~1e-2-level error is expected.
    err_h = float(jnp.max(jnp.abs(h_nodes - ref_h)))
    err_o = float(jnp.max(jnp.abs(out - ref_out)))
    assert err_h < 5e-2, f"hidden-state mismatch vs reference: {err_h}"
    assert err_o < 5e-2, f"decoder-output mismatch vs reference: {err_o}"
    print("KERNEL_OK")
</pallas_src>

<mosaic_0001>
module attributes {stable_mosaic.version = 11 : i64} {
  func.func @_tree2tree_kernel(%arg0: i32, %arg1: memref<8xi32, #tpu.memory_space<smem>>, %arg2: memref<16x32xf32, #tpu.memory_space<vmem>>, %arg3: memref<48x48xbf16, #tpu.memory_space<vmem>>, %arg4: memref<32x128xbf16, #tpu.memory_space<vmem>>, %arg5: memref<128x128xbf16, #tpu.memory_space<vmem>>, %arg6: memref<1x128xf32, #tpu.memory_space<vmem>>, %arg7: memref<128x32xbf16, #tpu.memory_space<vmem>>, %arg8: memref<1x32xf32, #tpu.memory_space<vmem>>, %arg9: memref<128x128xbf16, #tpu.memory_space<vmem>>, %arg10: memref<1x128xf32, #tpu.memory_space<vmem>>, %arg11: memref<128x128xbf16, #tpu.memory_space<vmem>>, %arg12: memref<1x128xf32, #tpu.memory_space<vmem>>, %arg13: memref<48x128xf32, #tpu.memory_space<vmem>>, %arg14: memref<8x128xf32, #tpu.memory_space<vmem>>, %arg15: memref<48x128xbf16, #tpu.memory_space<vmem>>, %arg16: memref<48x128xbf16, #tpu.memory_space<vmem>>) attributes {dimension_semantics = [#tpu.dimension_semantics<arbitrary>], iteration_bounds = array<i64: 1>, scalar_prefetch = 1 : i64, scratch_operands = 2 : i64, tpu.core_type = #tpu.core_type<tc>, window_params = [{pipeline_mode = #tpu.pipeline_mode<synchronous>, transform_indices = @transform_0, window_bounds = array<i64: 16, 32>}, {pipeline_mode = #tpu.pipeline_mode<synchronous>, transform_indices = @transform_1, window_bounds = array<i64: 48, 48>}, {pipeline_mode = #tpu.pipeline_mode<synchronous>, transform_indices = @transform_2, window_bounds = array<i64: 32, 128>}, {pipeline_mode = #tpu.pipeline_mode<synchronous>, transform_indices = @transform_3, window_bounds = array<i64: 128, 128>}, {pipeline_mode = #tpu.pipeline_mode<synchronous>, transform_indices = @transform_4, window_bounds = array<i64: 1, 128>}, {pipeline_mode = #tpu.pipeline_mode<synchronous>, transform_indices = @transform_5, window_bounds = array<i64: 128, 32>}, {pipeline_mode = #tpu.pipeline_mode<synchronous>, transform_indices = @transform_6, window_bounds = array<i64: 1, 32>}, {pipeline_mode = #tpu.pipeline_mode<synchronous>, transform_indices = @transform_7, window_bounds = array<i64: 128, 128>}, {pipeline_mode = #tpu.pipeline_mode<synchronous>, transform_indices = @transform_8, window_bounds = array<i64: 1, 128>}, {pipeline_mode = #tpu.pipeline_mode<synchronous>, transform_indices = @transform_9, window_bounds = array<i64: 128, 128>}, {pipeline_mode = #tpu.pipeline_mode<synchronous>, transform_indices = @transform_10, window_bounds = array<i64: 1, 128>}, {pipeline_mode = #tpu.pipeline_mode<synchronous>, transform_indices = @transform_11, window_bounds = array<i64: 48, 128>}, {pipeline_mode = #tpu.pipeline_mode<synchronous>, transform_indices = @transform_12, window_bounds = array<i64: 8, 128>}]} {
    %cst = arith.constant 0.000000e+00 : f32
    %0 = vector.broadcast %cst : f32 to vector<16x96xf32>
    %cst_0 = arith.constant 0.000000e+00 : bf16
    %1 = vector.broadcast %cst_0 : bf16 to vector<48x128xbf16>
    %c0 = arith.constant 0 : index
    %c0_1 = arith.constant 0 : index
    %2 = vector.load %arg15[%c0, %c0_1] : memref<48x128xbf16, #tpu.memory_space<vmem>>, vector<48x128xbf16>
    tpu.vector_store %arg15[%c0, %c0_1], %1 {strides = array<i32>} : memref<48x128xbf16, #tpu.memory_space<vmem>>, vector<48x128xbf16>,
    %cst_2 = arith.constant 0.000000e+00 : bf16
    %3 = vector.broadcast %cst_2 : bf16 to vector<48x128xbf16>
    %c0_3 = arith.constant 0 : index
    %c0_4 = arith.constant 0 : index
    %4 = vector.load %arg16[%c0_3, %c0_4] : memref<48x128xbf16, #tpu.memory_space<vmem>>, vector<48x128xbf16>
    tpu.vector_store %arg16[%c0_3, %c0_4], %3 {strides = array<i32>} : memref<48x128xbf16, #tpu.memory_space<vmem>>, vector<48x128xbf16>,
    %c0_5 = arith.constant 0 : index
    %c0_6 = arith.constant 0 : index
    %5 = vector.load %arg6[%c0_5, %c0_6] : memref<1x128xf32, #tpu.memory_space<vmem>>, vector<1x128xf32>
    %c0_7 = arith.constant 0 : index
    %c0_8 = arith.constant 0 : index
    %6 = vector.load %arg2[%c0_7, %c0_8] : memref<16x32xf32, #tpu.memory_space<vmem>>, vector<16x32xf32>
    %7 = arith.truncf %6 : vector<16x32xf32> to vector<16x32xbf16>
    %c0_9 = arith.constant 0 : index
    %c0_10 = arith.constant 0 : index
    %8 = vector.load %arg4[%c0_9, %c0_10] : memref<32x128xbf16, #tpu.memory_space<vmem>>, vector<32x128xbf16>
    %cst_11 = arith.constant dense<0.000000e+00> : vector<16x128xf32>
    %9 = tpu.matmul %7, %8, %cst_11 {dimension_numbers = #tpu.dot_dimension_numbers<[1], [0], [0], [1], [0, 0, 1, 1], [], []>} : vector<16x32xbf16>, vector<32x128xbf16>, vector<16x128xf32> -> vector<16x128xf32>
    %10 = vector.broadcast %5 : vector<1x128xf32> to vector<16x128xf32>
    %11 = arith.addf %9, %10 : vector<16x128xf32>
    %12 = vector.extract_strided_slice %11 {offsets = [0, 0], sizes = [16, 32], strides = [1, 1]} : vector<16x128xf32> to vector<16x32xf32>
    %13 = arith.negf %12 : vector<16x32xf32>
    %14 = math.exp %13 : vector<16x32xf32>
    %cst_12 = arith.constant 1.000000e+00 : f32
    %15 = vector.broadcast %cst_12 : f32 to vector<16x32xf32>
    %16 = arith.addf %15, %14 : vector<16x32xf32>
    %17 = arith.divf %15, %16 : vector<16x32xf32>
    %18 = vector.extract_strided_slice %11 {offsets = [0, 32], sizes = [16, 32], strides = [1, 1]} : vector<16x128xf32> to vector<16x32xf32>
    %19 = arith.negf %18 : vector<16x32xf32>
    %20 = math.exp %19 : vector<16x32xf32>
    %cst_13 = arith.constant 1.000000e+00 : f32
    %21 = vector.broadcast %cst_13 : f32 to vector<16x32xf32>
    %22 = arith.addf %21, %20 : vector<16x32xf32>
    %23 = arith.divf %21, %22 : vector<16x32xf32>
    %24 = vector.extract_strided_slice %11 {offsets = [0, 64], sizes = [16, 32], strides = [1, 1]} : vector<16x128xf32> to vector<16x32xf32>
    %25 = math.tanh %24 : vector<16x32xf32>
    %26 = arith.mulf %17, %25 : vector<16x32xf32>
    %cst_14 = arith.constant 0.000000e+00 : f32
    %27 = vector.broadcast %cst_14 : f32 to vector<16x32xf32>
    %28 = arith.addf %26, %27 : vector<16x32xf32>
    %29 = math.tanh %28 : vector<16x32xf32>
    %30 = arith.mulf %23, %29 : vector<16x32xf32>
    %31 = tpu.concatenate %30, %0 in 1 : vector<16x32xf32>, vector<16x96xf32> -> vector<16x128xf32>
    %c0_15 = arith.constant 0 : index
    %c0_16 = arith.constant 0 : index
    %32 = vector.load %arg13[%c0_15, %c0_16] : memref<48x128xf32, #tpu.memory_space<vmem>>, vector<16x128xf32>
    tpu.vector_store %arg13[%c0_15, %c0_16], %31 {strides = array<i32>} : memref<48x128xf32, #tpu.memory_space<vmem>>, vector<16x128xf32>,
    %33 = arith.truncf %31 : vector<16x128xf32> to vector<16x128xbf16>
    %c0_17 = arith.constant 0 : index
    %c0_18 = arith.constant 0 : index
    %34 = vector.load %arg15[%c0_17, %c0_18] : memref<48x128xbf16, #tpu.memory_space<vmem>>, vector<16x128xbf16>
    tpu.vector_store %arg15[%c0_17, %c0_18], %33 {strides = array<i32>} : memref<48x128xbf16, #tpu.memory_space<vmem>>, vector<16x128xbf16>,
    %35 = arith.truncf %31 : vector<16x128xf32> to vector<16x128xbf16>
    %c0_19 = arith.constant 0 : index
    %c0_20 = arith.constant 0 : index
    %36 = vector.load %arg7[%c0_19, %c0_20] : memref<128x32xbf16, #tpu.memory_space<vmem>>, vector<128x32xbf16>
    %cst_21 = arith.constant dense<0.000000e+00> : vector<16x32xf32>
    %37 = tpu.matmul %35, %36, %cst_21 {dimension_numbers = #tpu.dot_dimension_numbers<[1], [0], [0], [1], [0, 0, 1, 1], [], []>} : vector<16x128xbf16>, vector<128x32xbf16>, vector<16x32xf32> -> vector<16x32xf32>
    %c0_22 = arith.constant 0 : index
    %c0_23 = arith.constant 0 : index
    %38 = vector.load %arg8[%c0_22, %c0_23] : memref<1x32xf32, #tpu.memory_space<vmem>>, vector<1x32xf32>
    %39 = vector.broadcast %38 : vector<1x32xf32> to vector<16x32xf32>
    %40 = arith.addf %37, %39 : vector<16x32xf32>
    %41 = arith.negf %40 : vector<16x32xf32>
    %42 = math.exp %41 : vector<16x32xf32>
    %cst_24 = arith.constant 1.000000e+00 : f32
    %43 = vector.broadcast %cst_24 : f32 to vector<16x32xf32>
    %44 = arith.addf %43, %42 : vector<16x32xf32>
    %45 = arith.divf %43, %44 : vector<16x32xf32>
    %46 = arith.mulf %45, %28 : vector<16x32xf32>
    %47 = tpu.concatenate %46, %0 in 1 : vector<16x32xf32>, vector<16x96xf32> -> vector<16x128xf32>
    %48 = arith.truncf %47 : vector<16x128xf32> to vector<16x128xbf16>
    %c0_25 = arith.constant 0 : index
    %c0_26 = arith.constant 0 : index
    %49 = vector.load %arg16[%c0_25, %c0_26] : memref<48x128xbf16, #tpu.memory_space<vmem>>, vector<16x128xbf16>
    tpu.vector_store %arg16[%c0_25, %c0_26], %48 {strides = array<i32>} : memref<48x128xbf16, #tpu.memory_space<vmem>>, vector<16x128xbf16>,
    %c16 = arith.constant 16 : index
    %c0_27 = arith.constant 0 : index
    %50 = vector.load %arg3[%c16, %c0_27] : memref<48x48xbf16, #tpu.memory_space<vmem>>, vector<16x48xbf16>
    %c0_28 = arith.constant 0 : index
    %c0_29 = arith.constant 0 : index
    %51 = vector.load %arg15[%c0_28, %c0_29] : memref<48x128xbf16, #tpu.memory_space<vmem>>, vector<48x128xbf16>
    %cst_30 = arith.constant dense<0.000000e+00> : vector<16x128xf32>
    %52 = tpu.matmul %50, %51, %cst_30 {dimension_numbers = #tpu.dot_dimension_numbers<[1], [0], [0], [1], [0, 0, 1, 1], [], []>} : vector<16x48xbf16>, vector<48x128xbf16>, vector<16x128xf32> -> vector<16x128xf32>
    %c0_31 = arith.constant 0 : index
    %c0_32 = arith.constant 0 : index
    %53 = vector.load %arg16[%c0_31, %c0_32] : memref<48x128xbf16, #tpu.memory_space<vmem>>, vector<48x128xbf16>
    %cst_33 = arith.constant dense<0.000000e+00> : vector<16x128xf32>
    %54 = tpu.matmul %50, %53, %cst_33 {dimension_numbers = #tpu.dot_dimension_numbers<[1], [0], [0], [1], [0, 0, 1, 1], [], []>} : vector<16x48xbf16>, vector<48x128xbf16>, vector<16x128xf32> -> vector<16x128xf32>
    %55 = arith.truncf %52 : vector<16x128xf32> to vector<16x128xbf16>
    %c0_34 = arith.constant 0 : index
    %c0_35 = arith.constant 0 : index
    %56 = vector.load %arg5[%c0_34, %c0_35] : memref<128x128xbf16, #tpu.memory_space<vmem>>, vector<128x128xbf16>
    %cst_36 = arith.constant dense<0.000000e+00> : vector<16x128xf32>
    %57 = tpu.matmul %55, %56, %cst_36 {dimension_numbers = #tpu.dot_dimension_numbers<[1], [0], [0], [1], [0, 0, 1, 1], [], []>} : vector<16x128xbf16>, vector<128x128xbf16>, vector<16x128xf32> -> vector<16x128xf32>
    %58 = vector.broadcast %5 : vector<1x128xf32> to vector<16x128xf32>
    %59 = arith.addf %57, %58 : vector<16x128xf32>
    %60 = vector.extract_strided_slice %54 {offsets = [0, 0], sizes = [16, 32], strides = [1, 1]} : vector<16x128xf32> to vector<16x32xf32>
    %61 = vector.extract_strided_slice %59 {offsets = [0, 0], sizes = [16, 32], strides = [1, 1]} : vector<16x128xf32> to vector<16x32xf32>
    %62 = arith.negf %61 : vector<16x32xf32>
    %63 = math.exp %62 : vector<16x32xf32>
    %cst_37 = arith.constant 1.000000e+00 : f32
    %64 = vector.broadcast %cst_37 : f32 to vector<16x32xf32>
    %65 = arith.addf %64, %63 : vector<16x32xf32>
    %66 = arith.divf %64, %65 : vector<16x32xf32>
    %67 = vector.extract_strided_slice %59 {offsets = [0, 32], sizes = [16, 32], strides = [1, 1]} : vector<16x128xf32> to vector<16x32xf32>
    %68 = arith.negf %67 : vector<16x32xf32>
    %69 = math.exp %68 : vector<16x32xf32>
    %cst_38 = arith.constant 1.000000e+00 : f32
    %70 = vector.broadcast %cst_38 : f32 to vector<16x32xf32>
    %71 = arith.addf %70, %69 : vector<16x32xf32>
    %72 = arith.divf %70, %71 : vector<16x32xf32>
    %73 = vector.extract_strided_slice %59 {offsets = [0, 64], sizes = [16, 32], strides = [1, 1]} : vector<16x128xf32> to vector<16x32xf32>
    %74 = math.tanh %73 : vector<16x32xf32>
    %75 = arith.mulf %66, %74 : vector<16x32xf32>
    %76 = arith.addf %75, %60 : vector<16x32xf32>
    %77 = math.tanh %76 : vector<16x32xf32>
    %78 = arith.mulf %72, %77 : vector<16x32xf32>
    %79 = tpu.concatenate %78, %0 in 1 : vector<16x32xf32>, vector<16x96xf32> -> vector<16x128xf32>
    %c16_39 = arith.constant 16 : index
    %c0_40 = arith.constant 0 : index
    %80 = vector.load %arg13[%c16_39, %c0_40] : memref<48x128xf32, #tpu.memory_space<vmem>>, vector<16x128xf32>
    tpu.vector_store %arg13[%c16_39, %c0_40], %79 {strides = array<i32>} : memref<48x128xf32, #tpu.memory_space<vmem>>, vector<16x128xf32>,
    %81 = arith.truncf %79 : vector<16x128xf32> to vector<16x128xbf16>
    %c16_41 = arith.constant 16 : index
    %c0_42 = arith.constant 0 : index
    %82 = vector.load %arg15[%c16_41, %c0_42] : memref<48x128xbf16, #tpu.memory_space<vmem>>, vector<16x128xbf16>
    tpu.vector_store %arg15[%c16_41, %c0_42], %81 {strides = array<i32>} : memref<48x128xbf16, #tpu.memory_space<vmem>>, vector<16x128xbf16>,
    %83 = arith.truncf %79 : vector<16x128xf32> to vector<16x128xbf16>
    %c0_43 = arith.constant 0 : index
    %c0_44 = arith.constant 0 : index
    %84 = vector.load %arg7[%c0_43, %c0_44] : memref<128x32xbf16, #tpu.memory_space<vmem>>, vector<128x32xbf16>
    %cst_45 = arith.constant dense<0.000000e+00> : vector<16x32xf32>
    %85 = tpu.matmul %83, %84, %cst_45 {dimension_numbers = #tpu.dot_dimension_numbers<[1], [0], [0], [1], [0, 0, 1, 1], [], []>} : vector<16x128xbf16>, vector<128x32xbf16>, vector<16x32xf32> -> vector<16x32xf32>
    %c0_46 = arith.constant 0 : index
    %c0_47 = arith.constant 0 : index
    %86 = vector.load %arg8[%c0_46, %c0_47] : memref<1x32xf32, #tpu.memory_space<vmem>>, vector<1x32xf32>
    %87 = vector.broadcast %86 : vector<1x32xf32> to vector<16x32xf32>
    %88 = arith.addf %85, %87 : vector<16x32xf32>
    %89 = arith.negf %88 : vector<16x32xf32>
    %90 = math.exp %89 : vector<16x32xf32>
    %cst_48 = arith.constant 1.000000e+00 : f32
    %91 = vector.broadcast %cst_48 : f32 to vector<16x32xf32>
    %92 = arith.addf %91, %90 : vector<16x32xf32>
    %93 = arith.divf %91, %92 : vector<16x32xf32>
    %94 = arith.mulf %93, %76 : vector<16x32xf32>
    %95 = tpu.concatenate %94, %0 in 1 : vector<16x32xf32>, vector<16x96xf32> -> vector<16x128xf32>
    %96 = arith.truncf %95 : vector<16x128xf32> to vector<16x128xbf16>
    %c16_49 = arith.constant 16 : index
    %c0_50 = arith.constant 0 : index
    %97 = vector.load %arg16[%c16_49, %c0_50] : memref<48x128xbf16, #tpu.memory_space<vmem>>, vector<16x128xbf16>
    tpu.vector_store %arg16[%c16_49, %c0_50], %96 {strides = array<i32>} : memref<48x128xbf16, #tpu.memory_space<vmem>>, vector<16x128xbf16>,
    %c32 = arith.constant 32 : index
    %c0_51 = arith.constant 0 : index
    %98 = vector.load %arg3[%c32, %c0_51] : memref<48x48xbf16, #tpu.memory_space<vmem>>, vector<16x48xbf16>
    %c0_52 = arith.constant 0 : index
    %c0_53 = arith.constant 0 : index
    %99 = vector.load %arg15[%c0_52, %c0_53] : memref<48x128xbf16, #tpu.memory_space<vmem>>, vector<48x128xbf16>
    %cst_54 = arith.constant dense<0.000000e+00> : vector<16x128xf32>
    %100 = tpu.matmul %98, %99, %cst_54 {dimension_numbers = #tpu.dot_dimension_numbers<[1], [0], [0], [1], [0, 0, 1, 1], [], []>} : vector<16x48xbf16>, vector<48x128xbf16>, vector<16x128xf32> -> vector<16x128xf32>
    %c0_55 = arith.constant 0 : index
    %c0_56 = arith.constant 0 : index
    %101 = vector.load %arg16[%c0_55, %c0_56] : memref<48x128xbf16, #tpu.memory_space<vmem>>, vector<48x128xbf16>
    %cst_57 = arith.constant dense<0.000000e+00> : vector<16x128xf32>
    %102 = tpu.matmul %98, %101, %cst_57 {dimension_numbers = #tpu.dot_dimension_numbers<[1], [0], [0], [1], [0, 0, 1, 1], [], []>} : vector<16x48xbf16>, vector<48x128xbf16>, vector<16x128xf32> -> vector<16x128xf32>
    %103 = arith.truncf %100 : vector<16x128xf32> to vector<16x128xbf16>
    %c0_58 = arith.constant 0 : index
    %c0_59 = arith.constant 0 : index
    %104 = vector.load %arg5[%c0_58, %c0_59] : memref<128x128xbf16, #tpu.memory_space<vmem>>, vector<128x128xbf16>
    %cst_60 = arith.constant dense<0.000000e+00> : vector<16x128xf32>
    %105 = tpu.matmul %103, %104, %cst_60 {dimension_numbers = #tpu.dot_dimension_numbers<[1], [0], [0], [1], [0, 0, 1, 1], [], []>} : vector<16x128xbf16>, vector<128x128xbf16>, vector<16x128xf32> -> vector<16x128xf32>
    %106 = vector.broadcast %5 : vector<1x128xf32> to vector<16x128xf32>
    %107 = arith.addf %105, %106 : vector<16x128xf32>
    %108 = vector.extract_strided_slice %102 {offsets = [0, 0], sizes = [16, 32], strides = [1, 1]} : vector<16x128xf32> to vector<16x32xf32>
    %109 = vector.extract_strided_slice %107 {offsets = [0, 0], sizes = [16, 32], strides = [1, 1]} : vector<16x128xf32> to vector<16x32xf32>
    %110 = arith.negf %109 : vector<16x32xf32>
    %111 = math.exp %110 : vector<16x32xf32>
    %cst_61 = arith.constant 1.000000e+00 : f32
    %112 = vector.broadcast %cst_61 : f32 to vector<16x32xf32>
    %113 = arith.addf %112, %111 : vector<16x32xf32>
    %114 = arith.divf %112, %113 : vector<16x32xf32>
    %115 = vector.extract_strided_slice %107 {offsets = [0, 32], sizes = [16, 32], strides = [1, 1]} : vector<16x128xf32> to vector<16x32xf32>
    %116 = arith.negf %115 : vector<16x32xf32>
    %117 = math.exp %116 : vector<16x32xf32>
    %cst_62 = arith.constant 1.000000e+00 : f32
    %118 = vector.broadcast %cst_62 : f32 to vector<16x32xf32>
    %119 = arith.addf %118, %117 : vector<16x32xf32>
    %120 = arith.divf %118, %119 : vector<16x32xf32>
    %121 = vector.extract_strided_slice %107 {offsets = [0, 64], sizes = [16, 32], strides = [1, 1]} : vector<16x128xf32> to vector<16x32xf32>
    %122 = math.tanh %121 : vector<16x32xf32>
    %123 = arith.mulf %114, %122 : vector<16x32xf32>
    %124 = arith.addf %123, %108 : vector<16x32xf32>
    %125 = math.tanh %124 : vector<16x32xf32>
    %126 = arith.mulf %120, %125 : vector<16x32xf32>
    %127 = tpu.concatenate %126, %0 in 1 : vector<16x32xf32>, vector<16x96xf32> -> vector<16x128xf32>
    %c32_63 = arith.constant 32 : index
    %c0_64 = arith.constant 0 : index
    %128 = vector.load %arg13[%c32_63, %c0_64] : memref<48x128xf32, #tpu.memory_space<vmem>>, vector<16x128xf32>
    tpu.vector_store %arg13[%c32_63, %c0_64], %127 {strides = array<i32>} : memref<48x128xf32, #tpu.memory_space<vmem>>, vector<16x128xf32>,
    %129 = arith.truncf %127 : vector<16x128xf32> to vector<16x128xbf16>
    %c32_65 = arith.constant 32 : index
    %c0_66 = arith.constant 0 : index
    %130 = vector.load %arg15[%c32_65, %c0_66] : memref<48x128xbf16, #tpu.memory_space<vmem>>, vector<16x128xbf16>
    tpu.vector_store %arg15[%c32_65, %c0_66], %129 {strides = array<i32>} : memref<48x128xbf16, #tpu.memory_space<vmem>>, vector<16x128xbf16>,
    %c0_67 = arith.constant 0 : index
    %131 = memref.load %arg1[%c0_67] : memref<8xi32, #tpu.memory_space<smem>>
    %132 = arith.index_cast %131 : i32 to index
    %c0_68 = arith.constant 0 : index
    %133 = vector.load %arg13[%132, %c0_68] : memref<48x128xf32, #tpu.memory_space<vmem>>, vector<1x128xf32>
    %c1 = arith.constant 1 : index
    %134 = memref.load %arg1[%c1] : memref<8xi32, #tpu.memory_space<smem>>
    %135 = arith.index_cast %134 : i32 to index
    %c0_69 = arith.constant 0 : index
    %136 = vector.load %arg13[%135, %c0_69] : memref<48x128xf32, #tpu.memory_space<vmem>>, vector<1x128xf32>
    %c2 = arith.constant 2 : index
    %137 = memref.load %arg1[%c2] : memref<8xi32, #tpu.memory_space<smem>>
    %138 = arith.index_cast %137 : i32 to index
    %c0_70 = arith.constant 0 : index
    %139 = vector.load %arg13[%138, %c0_70] : memref<48x128xf32, #tpu.memory_space<vmem>>, vector<1x128xf32>
    %c3 = arith.constant 3 : index
    %140 = memref.load %arg1[%c3] : memref<8xi32, #tpu.memory_space<smem>>
    %141 = arith.index_cast %140 : i32 to index
    %c0_71 = arith.constant 0 : index
    %142 = vector.load %arg13[%141, %c0_71] : memref<48x128xf32, #tpu.memory_space<vmem>>, vector<1x128xf32>
    %c4 = arith.constant 4 : index
    %143 = memref.load %arg1[%c4] : memref<8xi32, #tpu.memory_space<smem>>
    %144 = arith.index_cast %143 : i32 to index
    %c0_72 = arith.constant 0 : index
    %145 = vector.load %arg13[%144, %c0_72] : memref<48x128xf32, #tpu.memory_space<vmem>>, vector<1x128xf32>
    %c5 = arith.constant 5 : index
    %146 = memref.load %arg1[%c5] : memref<8xi32, #tpu.memory_space<smem>>
    %147 = arith.index_cast %146 : i32 to index
    %c0_73 = arith.constant 0 : index
    %148 = vector.load %arg13[%147, %c0_73] : memref<48x128xf32, #tpu.memory_space<vmem>>, vector<1x128xf32>
    %c6 = arith.constant 6 : index
    %149 = memref.load %arg1[%c6] : memref<8xi32, #tpu.memory_space<smem>>
    %150 = arith.index_cast %149 : i32 to index
    %c0_74 = arith.constant 0 : index
    %151 = vector.load %arg13[%150, %c0_74] : memref<48x128xf32, #tpu.memory_space<vmem>>, vector<1x128xf32>
    %c7 = arith.constant 7 : index
    %152 = memref.load %arg1[%c7] : memref<8xi32, #tpu.memory_space<smem>>
    %153 = arith.index_cast %152 : i32 to index
    %c0_75 = arith.constant 0 : index
    %154 = vector.load %arg13[%153, %c0_75] : memref<48x128xf32, #tpu.memory_space<vmem>>, vector<1x128xf32>
    %155 = tpu.concatenate %133, %136, %139, %142, %145, %148, %151, %154 in 0 : vector<1x128xf32>, vector<1x128xf32>, vector<1x128xf32>, vector<1x128xf32>, vector<1x128xf32>, vector<1x128xf32>, vector<1x128xf32>, vector<1x128xf32> -> vector<8x128xf32>
    %156 = arith.truncf %155 : vector<8x128xf32> to vector<8x128xbf16>
    %c0_76 = arith.constant 0 : index
    %c0_77 = arith.constant 0 : index
    %157 = vector.load %arg9[%c0_76, %c0_77] : memref<128x128xbf16, #tpu.memory_space<vmem>>, vector<128x128xbf16>
    %cst_78 = arith.constant dense<0.000000e+00> : vector<8x128xf32>
    %158 = tpu.matmul %156, %157, %cst_78 {dimension_numbers = #tpu.dot_dimension_numbers<[1], [0], [0], [1], [0, 0, 1, 1], [], []>} : vector<8x128xbf16>, vector<128x128xbf16>, vector<8x128xf32> -> vector<8x128xf32>
    %c0_79 = arith.constant 0 : index
    %c0_80 = arith.constant 0 : index
    %159 = vector.load %arg10[%c0_79, %c0_80] : memref<1x128xf32, #tpu.memory_space<vmem>>, vector<1x128xf32>
    %160 = vector.broadcast %159 : vector<1x128xf32> to vector<8x128xf32>
    %161 = arith.addf %158, %160 : vector<8x128xf32>
    %162 = math.tanh %161 : vector<8x128xf32>
    %163 = arith.truncf %162 : vector<8x128xf32> to vector<8x128xbf16>
    %c0_81 = arith.constant 0 : index
    %c0_82 = arith.constant 0 : index
    %164 = vector.load %arg11[%c0_81, %c0_82] : memref<128x128xbf16, #tpu.memory_space<vmem>>, vector<128x128xbf16>
    %cst_83 = arith.constant dense<0.000000e+00> : vector<8x128xf32>
    %165 = tpu.matmul %163, %164, %cst_83 {dimension_numbers = #tpu.dot_dimension_numbers<[1], [0], [0], [1], [0, 0, 1, 1], [], []>} : vector<8x128xbf16>, vector<128x128xbf16>, vector<8x128xf32> -> vector<8x128xf32>
    %c0_84 = arith.constant 0 : index
    %c0_85 = arith.constant 0 : index
    %166 = vector.load %arg12[%c0_84, %c0_85] : memref<1x128xf32, #tpu.memory_space<vmem>>, vector<1x128xf32>
    %167 = vector.broadcast %166 : vector<1x128xf32> to vector<8x128xf32>
    %168 = arith.addf %165, %167 : vector<8x128xf32>
    %c0_86 = arith.constant 0 : index
    %c0_87 = arith.constant 0 : index
    %169 = vector.load %arg14[%c0_86, %c0_87] : memref<8x128xf32, #tpu.memory_space<vmem>>, vector<8x128xf32>
    tpu.vector_store %arg14[%c0_86, %c0_87], %168 {strides = array<i32>} : memref<8x128xf32, #tpu.memory_space<vmem>>, vector<8x128xf32>,
    return
  }
  func.func @transform_0(%arg0: i32, %arg1: memref<8xi32, #tpu.memory_space<smem>>) -> (i32, i32) {
    %c0_i32 = arith.constant 0 : i32
    %c0_i32_0 = arith.constant 0 : i32
    %c0_i32_1 = arith.constant 0 : i32
    return %c0_i32, %c0_i32_0 : i32, i32
  }
  func.func @transform_1(%arg0: i32, %arg1: memref<8xi32, #tpu.memory_space<smem>>) -> (i32, i32) {
    %c0_i32 = arith.constant 0 : i32
    %c0_i32_0 = arith.constant 0 : i32
    %c0_i32_1 = arith.constant 0 : i32
    return %c0_i32, %c0_i32_0 : i32, i32
  }
  func.func @transform_2(%arg0: i32, %arg1: memref<8xi32, #tpu.memory_space<smem>>) -> (i32, i32) {
    %c0_i32 = arith.constant 0 : i32
    %c0_i32_0 = arith.constant 0 : i32
    %c0_i32_1 = arith.constant 0 : i32
    return %c0_i32, %c0_i32_0 : i32, i32
  }
  func.func @transform_3(%arg0: i32, %arg1: memref<8xi32, #tpu.memory_space<smem>>) -> (i32, i32) {
    %c0_i32 = arith.constant 0 : i32
    %c0_i32_0 = arith.constant 0 : i32
    %c0_i32_1 = arith.constant 0 : i32
    return %c0_i32, %c0_i32_0 : i32, i32
  }
  func.func @transform_4(%arg0: i32, %arg1: memref<8xi32, #tpu.memory_space<smem>>) -> (i32, i32) {
    %c0_i32 = arith.constant 0 : i32
    %c0_i32_0 = arith.constant 0 : i32
    %c0_i32_1 = arith.constant 0 : i32
    return %c0_i32, %c0_i32_0 : i32, i32
  }
  func.func @transform_5(%arg0: i32, %arg1: memref<8xi32, #tpu.memory_space<smem>>) -> (i32, i32) {
    %c0_i32 = arith.constant 0 : i32
    %c0_i32_0 = arith.constant 0 : i32
    %c0_i32_1 = arith.constant 0 : i32
    return %c0_i32, %c0_i32_0 : i32, i32
  }
  func.func @transform_6(%arg0: i32, %arg1: memref<8xi32, #tpu.memory_space<smem>>) -> (i32, i32) {
    %c0_i32 = arith.constant 0 : i32
    %c0_i32_0 = arith.constant 0 : i32
    %c0_i32_1 = arith.constant 0 : i32
    return %c0_i32, %c0_i32_0 : i32, i32
  }
  func.func @transform_7(%arg0: i32, %arg1: memref<8xi32, #tpu.memory_space<smem>>) -> (i32, i32) {
    %c0_i32 = arith.constant 0 : i32
    %c0_i32_0 = arith.constant 0 : i32
    %c0_i32_1 = arith.constant 0 : i32
    return %c0_i32, %c0_i32_0 : i32, i32
  }
  func.func @transform_8(%arg0: i32, %arg1: memref<8xi32, #tpu.memory_space<smem>>) -> (i32, i32) {
    %c0_i32 = arith.constant 0 : i32
    %c0_i32_0 = arith.constant 0 : i32
    %c0_i32_1 = arith.constant 0 : i32
    return %c0_i32, %c0_i32_0 : i32, i32
  }
  func.func @transform_9(%arg0: i32, %arg1: memref<8xi32, #tpu.memory_space<smem>>) -> (i32, i32) {
    %c0_i32 = arith.constant 0 : i32
    %c0_i32_0 = arith.constant 0 : i32
    %c0_i32_1 = arith.constant 0 : i32
    return %c0_i32, %c0_i32_0 : i32, i32
  }
  func.func @transform_10(%arg0: i32, %arg1: memref<8xi32, #tpu.memory_space<smem>>) -> (i32, i32) {
    %c0_i32 = arith.constant 0 : i32
    %c0_i32_0 = arith.constant 0 : i32
    %c0_i32_1 = arith.constant 0 : i32
    return %c0_i32, %c0_i32_0 : i32, i32
  }
  func.func @transform_11(%arg0: i32, %arg1: memref<8xi32, #tpu.memory_space<smem>>) -> (i32, i32) {
    %c0_i32 = arith.constant 0 : i32
    %c0_i32_0 = arith.constant 0 : i32
    %c0_i32_1 = arith.constant 0 : i32
    return %c0_i32, %c0_i32_0 : i32, i32
  }
  func.func @transform_12(%arg0: i32, %arg1: memref<8xi32, #tpu.memory_space<smem>>) -> (i32, i32) {
    %c0_i32 = arith.constant 0 : i32
    %c0_i32_0 = arith.constant 0 : i32
    %c0_i32_1 = arith.constant 0 : i32
    return %c0_i32, %c0_i32_0 : i32, i32
  }
}

</mosaic_0001>

<llo_original>
// kernel: tpu_custom_call.1
$region0: #{tpu_custom_call.1}
  #allocation0 [shape = 'u32[]', space=smem, size = 0x4, offset = 0x4, fixed_abs, tag = 'smem constant byte address 0x4 - core index']
  #allocation1 [shape = 'u32[72,128]{1,0:T(1,128)}', space=vmem, size = 0x9000, scoped, tag = 'internal scratch']
  #allocation2 [shape = 'bf16[48,128]{1,0:T(8,128)(2,1)}', space=vmem, size = 0x3000, scoped, tag = 'scratch operand']
  #allocation3 [shape = 'bf16[48,128]{1,0:T(8,128)(2,1)}', space=vmem, size = 0x3000, scoped, tag = 'scratch operand']
  #allocation4 [shape = 's32[1]{0}', space=sflag, size = 0x4, scoped, tag = 'scoped memory for tpu_custom_call.1']
  #allocation5 [shape = 'u8[512]{0}', space=smem, size = 0x200, scoped, tag = 'prefetched SMEM operand 0']
  %s0 = inlined_call_operand.vmem [shape: s32[8], index: 0, kind: input, shape index: {}]
  %s1 = inlined_call_operand.vmem [shape: f32[16,32], index: 1, kind: input, shape index: {}]
  %s2 = inlined_call_operand.hbm [shape: bf16[48,48], index: 2, kind: input, shape index: {}]
  %s3 = inlined_call_operand.hbm [shape: bf16[32,128], index: 3, kind: input, shape index: {}]
  %s4 = inlined_call_operand.vmem [shape: bf16[128,128], index: 4, kind: input, shape index: {}]
  %s5 = inlined_call_operand.vmem [shape: f32[1,128], index: 5, kind: input, shape index: {}]
  %s6 = inlined_call_operand.vmem [shape: bf16[128,32], index: 6, kind: input, shape index: {}]
  %s7 = inlined_call_operand.vmem [shape: f32[1,32], index: 7, kind: input, shape index: {}]
  %s8 = inlined_call_operand.hbm [shape: bf16[128,128], index: 8, kind: input, shape index: {}]
  %s9 = inlined_call_operand.vmem [shape: f32[1,128], index: 9, kind: input, shape index: {}]
  %s10 = inlined_call_operand.hbm [shape: bf16[128,128], index: 10, kind: input, shape index: {}]
  %s11 = inlined_call_operand.vmem [shape: f32[1,128], index: 11, kind: input, shape index: {}]
  %s12 = inlined_call_operand.hbm [shape: f32[48,128], index: 12, kind: output, shape index: {0}]
  %s13 = inlined_call_operand.hbm [shape: f32[8,128], index: 13, kind: output, shape index: {1}]
  %14 = xla_tuple %s12, %s13
  %s15 = sld [smem:[#allocation0]]
  $region78: #{tpu_custom_call.1} parent=0
    _
  %s17 = ssub.s32 1, %s15
  %s18 = scalar_select 0, %s17, %s15
  %s20 = sshll.u32 %s0, 4
  %s21 = int_to_ptr.vmem [resolvable:$true] %s20
  %23 = dma.vmem_to_smem %s21, 16, [#allocation5], [#allocation4]
  %25 = dma.done [#allocation4], 16
  %26 = sfence
  $region1: #{tpu_custom_call.1} parent=0
    #allocation6 [shape = 'u8[12288]{0}', space=vmem, size = 0x3000, scoped, tag = 'input window, operand 2, single buffered']
    #allocation7 [shape = 's32[1]{0}', space=sflag, size = 0x4, scoped, tag = 'scoped memory for tpu_custom_call.1']
    #allocation8 [shape = 's32[1]{0}', space=sflag, size = 0x4, scoped, tag = 'scoped memory for tpu_custom_call.1']
    #allocation9 [shape = 'u8[8192]{0}', space=vmem, size = 0x2000, scoped, tag = 'input window, operand 3, single buffered']
    #allocation10 [shape = 's32[1]{0}', space=sflag, size = 0x4, scoped, tag = 'scoped memory for tpu_custom_call.1']
    #allocation11 [shape = 'u8[32768]{0}', space=vmem, size = 0x8000, scoped, tag = 'input window, operand 8, single buffered']
    #allocation12 [shape = 'u8[32768]{0}', space=vmem, size = 0x8000, scoped, tag = 'input window, operand 10, single buffered']
    #allocation13 [shape = 's32[1]{0}', space=sflag, size = 0x4, scoped, tag = 'scoped memory for tpu_custom_call.1']
    #allocation14 [shape = 'u8[24576]{0}', space=vmem, size = 0x6000, scoped, tag = 'output window, operand 0, single buffered']
    #allocation15 [shape = 'u8[4096]{0}', space=vmem, size = 0x1000, scoped, tag = 'output window, operand 1, single buffered']
    #allocation16 [shape = 's32[1]{0}', space=sflag, size = 0x4, scoped, tag = 'scoped memory for tpu_custom_call.1']
    %27 = vsyncpa [#allocation7], 0
    %28 = vsyncpa [#allocation10], 0
    %29 = vsyncpa [#allocation13], 0
    %30 = vsyncpa [#allocation8], 0
    %31 = vsyncpa [#allocation16], 0
    // Predicated region
    $region2: #{tpu_custom_call.1} parent=1 // pred_check
      _
    $region3: #{tpu_custom_call.1} parent=1 // pred_check_branch
      %33 = sbr.rel (0) target = $region5
    $region4: #{tpu_custom_call.1} parent=1 // pred_region
      _
    $region5: #{tpu_custom_call.1} parent=1 // pred_fallthru
      _
    // Predicated region
    $region6: #{tpu_custom_call.1} parent=1 // pred_check
      _
    $region7: #{tpu_custom_call.1} parent=1 // pred_check_branch
      %35 = sbr.rel (0) target = $region9
    $region8: #{tpu_custom_call.1} parent=1 // pred_region
      %37 = vsyncadd [#allocation7], 0
      %s38 = sshll.u32 %s2, 4
      %s39 = int_to_ptr.hbm [resolvable:$true] %s38
      %s40 = sshll.u32 [#allocation6], 4
      %s41 = int_to_ptr.vmem [resolvable:$true] %s40
      %46 = dma.hbm_to_vmem [thread:$0]  %s39, 384, %s41, [#allocation7], 64, 64, 4
    $region9: #{tpu_custom_call.1} parent=1 // pred_fallthru
      _
    // Predicated region
    $region10: #{tpu_custom_call.1} parent=1 // pred_check
      _
    $region11: #{tpu_custom_call.1} parent=1 // pred_check_branch
      %48 = sbr.rel (0) target = $region13
    $region12: #{tpu_custom_call.1} parent=1 // pred_region
      %50 = vsyncadd [#allocation10], 0
      %s51 = sshll.u32 %s3, 4
      %s52 = int_to_ptr.hbm [resolvable:$true] %s51
      %s53 = sshll.u32 [#allocation9], 4
      %s54 = int_to_ptr.vmem [resolvable:$true] %s53
      %59 = dma.hbm_to_vmem [thread:$0]  %s52, 256, %s54, [#allocation10], 64, 64, 4
    $region13: #{tpu_custom_call.1} parent=1 // pred_fallthru
      _
    // Predicated region
    $region14: #{tpu_custom_call.1} parent=1 // pred_check
      _
    $region15: #{tpu_custom_call.1} parent=1 // pred_check_branch
      %61 = sbr.rel (0) target = $region17
    $region16: #{tpu_custom_call.1} parent=1 // pred_region
      _
    $region17: #{tpu_custom_call.1} parent=1 // pred_fallthru
      _
    // Predicated region
    $region18: #{tpu_custom_call.1} parent=1 // pred_check
      _
    $region19: #{tpu_custom_call.1} parent=1 // pred_check_branch
      %63 = sbr.rel (0) target = $region21
    $region20: #{tpu_custom_call.1} parent=1 // pred_region
      _
    $region21: #{tpu_custom_call.1} parent=1 // pred_fallthru
      _
    // Predicated region
    $region22: #{tpu_custom_call.1} parent=1 // pred_check
      _
    $region23: #{tpu_custom_call.1} parent=1 // pred_check_branch
      %65 = sbr.rel (0) target = $region25
    $region24: #{tpu_custom_call.1} parent=1 // pred_region
      _
    $region25: #{tpu_custom_call.1} parent=1 // pred_fallthru
      _
    // Predicated region
    $region26: #{tpu_custom_call.1} parent=1 // pred_check
      _
    $region27: #{tpu_custom_call.1} parent=1 // pred_check_branch
      %67 = sbr.rel (0) target = $region29
    $region28: #{tpu_custom_call.1} parent=1 // pred_region
      _
    $region29: #{tpu_custom_call.1} parent=1 // pred_fallthru
      _
    // Predicated region
    $region30: #{tpu_custom_call.1} parent=1 // pred_check
      _
    $region31: #{tpu_custom_call.1} parent=1 // pred_check_branch
      %69 = sbr.rel (0) target = $region33
    $region32: #{tpu_custom_call.1} parent=1 // pred_region
      %71 = vsyncadd [#allocation10], 0
      %s72 = sshll.u32 %s8, 4
      %s73 = int_to_ptr.hbm [resolvable:$true] %s72
      %s74 = sshll.u32 [#allocation11], 4
      %s75 = int_to_ptr.vmem [resolvable:$true] %s74
      %80 = dma.hbm_to_vmem [thread:$0]  %s73, 1024, %s75, [#allocation10], 64, 64, 4
    $region33: #{tpu_custom_call.1} parent=1 // pred_fallthru
      _
    // Predicated region
    $region34: #{tpu_custom_call.1} parent=1 // pred_check
      _
    $region35: #{tpu_custom_call.1} parent=1 // pred_check_branch
      %82 = sbr.rel (0) target = $region37
    $region36: #{tpu_custom_call.1} parent=1 // pred_region
      _
    $region37: #{tpu_custom_call.1} parent=1 // pred_fallthru
      _
    // Predicated region
    $region38: #{tpu_custom_call.1} parent=1 // pred_check
      _
    $region39: #{tpu_custom_call.1} parent=1 // pred_check_branch
      %84 = sbr.rel (0) target = $region41
    $region40: #{tpu_custom_call.1} parent=1 // pred_region
      %86 = vsyncadd [#allocation13], 0
      %s87 = sshll.u32 %s10, 4
      %s88 = int_to_ptr.hbm [resolvable:$true] %s87
      %s89 = sshll.u32 [#allocation12], 4
      %s90 = int_to_ptr.vmem [resolvable:$true] %s89
      %95 = dma.hbm_to_vmem [thread:$0]  %s88, 1024, %s90, [#allocation13], 64, 64, 4
    $region41: #{tpu_custom_call.1} parent=1 // pred_fallthru
      _
    // Predicated region
    $region42: #{tpu_custom_call.1} parent=1 // pred_check
      _
    $region43: #{tpu_custom_call.1} parent=1 // pred_check_branch
      %97 = sbr.rel (0) target = $region45
    $region44: #{tpu_custom_call.1} parent=1 // pred_region
      _
    $region45: #{tpu_custom_call.1} parent=1 // pred_fallthru
      _
    // Predicated region
    $region46: #{tpu_custom_call.1} parent=1 // pred_check
      _
    $region47: #{tpu_custom_call.1} parent=1 // pred_check_branch
      %99 = sbr.rel (0) target = $region49
    $region48: #{tpu_custom_call.1} parent=1 // pred_region
      %101 = dma.done [#allocation7], 384
    $region49: #{tpu_custom_call.1} parent=1 // pred_fallthru
      _
    // Predicated region
    $region50: #{tpu_custom_call.1} parent=1 // pred_check
      _
    $region51: #{tpu_custom_call.1} parent=1 // pred_check_branch
      %103 = sbr.rel (0) target = $region53
    $region52: #{tpu_custom_call.1} parent=1 // pred_region
      %105 = dma.done [#allocation10], 256
    $region53: #{tpu_custom_call.1} parent=1 // pred_fallthru
      _
    // Predicated region
    $region54: #{tpu_custom_call.1} parent=1 // pred_check
      _
    $region55: #{tpu_custom_call.1} parent=1 // pred_check_branch
      %107 = sbr.rel (0) target = $region57
    $region56: #{tpu_custom_call.1} parent=1 // pred_region
      %109 = dma.done [#allocation10], 1024
    $region57: #{tpu_custom_call.1} parent=1 // pred_fallthru
      _
    // Predicated region
    $region58: #{tpu_custom_call.1} parent=1 // pred_check
      _
    $region59: #{tpu_custom_call.1} parent=1 // pred_check_branch
      %111 = sbr.rel (0) target = $region61
    $region60: #{tpu_custom_call.1} parent=1 // pred_region
      %113 = dma.done [#allocation13], 1024
    $region61: #{tpu_custom_call.1} parent=1 // pred_fallthru
      _
    %115 = vst [vmem:[#allocation2] sm:$0xf] 0
    %116 = vst [vmem:[#allocation2 + $0x4] sm:$0xf] 0
    %117 = vst [vmem:[#allocation2 + $0x8] sm:$0xf] 0
    %118 = vst [vmem:[#allocation2 + $0xc] sm:$0xf] 0
    %119 = vst [vmem:[#allocation2 + $0x10] sm:$0xf] 0
    %120 = vst [vmem:[#allocation2 + $0x14] sm:$0xf] 0
    %121 = vst [vmem:[#allocation3] sm:$0xf] 0
    %122 = vst [vmem:[#allocation3 + $0x4] sm:$0xf] 0
    %123 = vst [vmem:[#allocation3 + $0x8] sm:$0xf] 0
    %124 = vst [vmem:[#allocation3 + $0xc] sm:$0xf] 0
    %125 = vst [vmem:[#allocation3 + $0x10] sm:$0xf] 0
    %126 = vst [vmem:[#allocation3 + $0x14] sm:$0xf] 0
    %v127 = vld [vmem:[%s5] sm:$0x1]
    %v128 = vld [vmem:[%s1] sm:$0xff]
    %v129 = vld [vmem:[%s1 + $0x8] sm:$0xff]
    %v130 = vpack.c.bf16 %v129, %v128
    %v131 = vld [vmem:[#allocation9] sm:$0xf]
    %v132 = vld [vmem:[#allocation9 + $0x4] sm:$0xf]
    %v133 = vld [vmem:[#allocation9 + $0x8] sm:$0xf]
    %v134 = vld [vmem:[#allocation9 + $0xc] sm:$0xf]
    %v136 = vperm.slane %v127, 0
    %v142 = vunpack.c.l.b16 %v131
    %v143 = vunpack.c.l.b16 %v132
    %v144 = vunpack.c.l.b16 %v133
    %v145 = vunpack.c.l.b16 %v134
    %v146 = vpack.c.b16 %v143, %v142
    %v147 = vpack.c.b16 %v145, %v144
    %vm150 = vcmask 261120
    %v152 = vsel %vm150, %v130, 0
    %154 = vmatpush.bf16.msra.mxu0 0
    %155 = vmatpush.bf16.msra.mxu0 0
    %156 = vmatpush.bf16.msra.mxu0 0
    %157 = vmatpush.bf16.msra.mxu0 0
    %158 = vmatpush.bf16.msra.mxu0 0
    %159 = vmatpush.bf16.msra.mxu0 0
    %160 = vmatpush.bf16.msra.mxu0 %v147
    %161 = vmatpush.bf16.msra.mxu0 %v146
    %162 = vmatmul.bf16.gmra.mxu0 %v152
    %v163 = vpop.f32.mrf.mxu0
    %v164 = vadd.f32 %v136, %v163
    %v165 = vpop.f32.mrf.mxu0
    %v166 = vadd.f32 %v136, %v165
    %167 = vdwg.mxu0
    %v168 = vxor.u32 %v164, 2147483648
    %v169 = vxor.u32 %v166, 2147483648
    %v170 = vmul.f32 %v168, 1.442695
    %v171 = vpow.pop %v170
    %v172 = vmul.f32 %v169, 1.442695
    %v173 = vpow.pop %v172
    %v174 = vadd.f32 %v171, 1.0
    %v175 = vadd.f32 %v173, 1.0
    %v176 = vrcp.pop %v174
    %v177 = vmul.f32 %v174, %v176
    %v178 = vsub.f32 1.0, %v177
    %v179 = vmul.f32 %v176, %v178
    %v180 = vadd.f32 %v176, %v179
    %vm181 = vweird.f32 %v174
    %vm182 = vweird.f32 %v176
    %vm183 = vmor %vm181, %vm182
    %v184 = vsel %vm183, %v176, %v180
    %v185 = vand.u32 2147483647, %v174
    %vm186 = vcmp.eq.f32.partialorder %v185, 8.507059e+37
    %v187 = vand.u32 %v174, 2147483648
    %v188 = vor.u32 1.1754944e-38, %v187
    %v189 = vsel %vm186, %v188, %v184
    %v190 = vmul.f32 1.0, %v189
    %v191 = vrcp.pop %v175
    %v192 = vmul.f32 %v175, %v191
    %v193 = vsub.f32 1.0, %v192
    %v194 = vmul.f32 %v191, %v193
    %v195 = vadd.f32 %v191, %v194
    %vm196 = vweird.f32 %v175
    %vm197 = vweird.f32 %v191
    %vm198 = vmor %vm196, %vm197
    %v199 = vsel %vm198, %v191, %v195
    %v200 = vand.u32 2147483647, %v175
    %vm201 = vcmp.eq.f32.partialorder %v200, 8.507059e+37
    %v202 = vand.u32 %v175, 2147483648
    %v203 = vor.u32 1.1754944e-38, %v202
    %v204 = vsel %vm201, %v203, %v199
    %v205 = vmul.f32 1.0, %v204
    %v206 = vtanh.pop %v164
    %v207 = vtanh.pop %v166
    %210 = vrot.lane.b32.xlu0 %v206, 64
    %v211 = vpop.permute.xlu0 %210
    %212 = vrot.lane.b32.xlu0 %v207, 64
    %v213 = vpop.permute.xlu0 %212
    %v216 = vmul.f32 %v190, %v211
    %v217 = vmul.f32 %v205, %v213
    %v218 = vadd.f32 %v216, 0.0
    %v219 = vadd.f32 %v217, 0.0
    %v220 = vtanh.pop %v218
    %v221 = vtanh.pop %v219
    %224 = vrot.lane.b32.xlu0 %v220, 32
    %v225 = vpop.permute.xlu0 %224
    %226 = vrot.lane.b32.xlu0 %v221, 32
    %v227 = vpop.permute.xlu0 %226
    %v230 = vmul.f32 %v190, %v225
    %v231 = vmul.f32 %v205, %v227
    %234 = vrot.lane.b32.xlu0 %v230, 96
    %v235 = vpop.permute.xlu0 %234
    %236 = vrot.lane.b32.xlu0 %v231, 96
    %v237 = vpop.permute.xlu0 %236
    %v240 = vsel %vm150, %v235, 0.0
    %v241 = vsel %vm150, %v237, 0.0
    %242 = vst [vmem:[#allocation14] sm:$0xff] %v240
    %243 = vst [vmem:[#allocation14 + $0x8] sm:$0xff] %v241
    %v244 = vpack.c.bf16 %v240, %v240
    %v245 = vpack.c.bf16 %v241, %v241
    %246 = vst [vmem:[#allocation2] sm:$0xf] %v244
    %247 = vst [vmem:[#allocation2 + $0x4] sm:$0xf] %v245
    %v248 = vld [vmem:[%s6] sm:$0xf]
    %v249 = vld [vmem:[%s6 + $0x4] sm:$0xf]
    %v250 = vld [vmem:[%s6 + $0x8] sm:$0xf]
    %v251 = vld [vmem:[%s6 + $0xc] sm:$0xf]
    %v252 = vld [vmem:[%s6 + $0x10] sm:$0xf]
    %v253 = vld [vmem:[%s6 + $0x14] sm:$0xf]
    %v254 = vld [vmem:[%s6 + $0x18] sm:$0xf]
    %v255 = vld [vmem:[%s6 + $0x1c] sm:$0xf]
    %v256 = vld [vmem:[%s6 + $0x20] sm:$0xf]
    %v257 = vld [vmem:[%s6 + $0x24] sm:$0xf]
    %v258 = vld [vmem:[%s6 + $0x28] sm:$0xf]
    %v259 = vld [vmem:[%s6 + $0x2c] sm:$0xf]
    %v260 = vld [vmem:[%s6 + $0x30] sm:$0xf]
    %v261 = vld [vmem:[%s6 + $0x34] sm:$0xf]
    %v262 = vld [vmem:[%s6 + $0x38] sm:$0xf]
    %v263 = vld [vmem:[%s6 + $0x3c] sm:$0xf]
    %v264 = vld [vmem:[%s7] sm:$0x1]
    %v266 = vperm.slane %v264, 0
    %v270 = vunpack.c.l.b16 %v244
    %v271 = vunpack.c.l.b16 %v245
    %v272 = vpack.c.b16 %v271, %v270
    %v290 = vunpack.c.l.b16 %v248
    %v291 = vunpack.c.l.b16 %v249
    %v292 = vunpack.c.l.b16 %v250
    %v293 = vunpack.c.l.b16 %v251
    %v294 = vunpack.c.l.b16 %v252
    %v295 = vunpack.c.l.b16 %v253
    %v296 = vunpack.c.l.b16 %v254
    %v297 = vunpack.c.l.b16 %v255
    %v298 = vunpack.c.l.b16 %v256
    %v299 = vunpack.c.l.b16 %v257
    %v300 = vunpack.c.l.b16 %v258
    %v301 = vunpack.c.l.b16 %v259
    %v302 = vunpack.c.l.b16 %v260
    %v303 = vunpack.c.l.b16 %v261
    %v304 = vunpack.c.l.b16 %v262
    %v305 = vunpack.c.l.b16 %v263
    %v306 = vpack.c.b16 %v291, %v290
    %v307 = vpack.c.b16 %v293, %v292
    %v308 = vpack.c.b16 %v295, %v294
    %v309 = vpack.c.b16 %v297, %v296
    %v310 = vpack.c.b16 %v299, %v298
    %v311 = vpack.c.b16 %v301, %v300
    %v312 = vpack.c.b16 %v303, %v302
    %v313 = vpack.c.b16 %v305, %v304
    %322 = vmatpush.bf16.msra.mxu0 %v313
    %323 = vmatpush.bf16.msra.mxu0 %v312
    %324 = vmatpush.bf16.msra.mxu0 %v311
    %325 = vmatpush.bf16.msra.mxu0 %v310
    %326 = vmatpush.bf16.msra.mxu0 %v309
    %327 = vmatpush.bf16.msra.mxu0 %v308
    %328 = vmatpush.bf16.msra.mxu0 %v307
    %329 = vmatpush.bf16.msra.mxu0 %v306
    %330 = vmatmul.bf16.gmra.mxu0 %v272
    %v331 = vpop.f32.mrf.mxu0
    %v332 = vadd.f32 %v266, %v331
    %v333 = vpop.f32.mrf.mxu0
    %v334 = vadd.f32 %v266, %v333
    %335 = vdwg.mxu0
    %v336 = vxor.u32 %v332, 2147483648
    %v337 = vxor.u32 %v334, 2147483648
    %v338 = vmul.f32 %v336, 1.442695
    %v339 = vpow.pop %v338
    %v340 = vmul.f32 %v337, 1.442695
    %v341 = vpow.pop %v340
    %v342 = vadd.f32 %v339, 1.0
    %v343 = vadd.f32 %v341, 1.0
    %v344 = vrcp.pop %v342
    %v345 = vmul.f32 %v342, %v344
    %v346 = vsub.f32 1.0, %v345
    %v347 = vmul.f32 %v344, %v346
    %v348 = vadd.f32 %v344, %v347
    %vm349 = vweird.f32 %v342
    %vm350 = vweird.f32 %v344
    %vm351 = vmor %vm349, %vm350
    %v352 = vsel %vm351, %v344, %v348
    %v353 = vand.u32 2147483647, %v342
    %vm354 = vcmp.eq.f32.partialorder %v353, 8.507059e+37
    %v355 = vand.u32 %v342, 2147483648
    %v356 = vor.u32 1.1754944e-38, %v355
    %v357 = vsel %vm354, %v356, %v352
    %v358 = vmul.f32 1.0, %v357
    %v359 = vrcp.pop %v343
    %v360 = vmul.f32 %v343, %v359
    %v361 = vsub.f32 1.0, %v360
    %v362 = vmul.f32 %v359, %v361
    %v363 = vadd.f32 %v359, %v362
    %vm364 = vweird.f32 %v343
    %vm365 = vweird.f32 %v359
    %vm366 = vmor %vm364, %vm365
    %v367 = vsel %vm366, %v359, %v363
    %v368 = vand.u32 2147483647, %v343
    %vm369 = vcmp.eq.f32.partialorder %v368, 8.507059e+37
    %v370 = vand.u32 %v343, 2147483648
    %v371 = vor.u32 1.1754944e-38, %v370
    %v372 = vsel %vm369, %v371, %v367
    %v373 = vmul.f32 1.0, %v372
    %v374 = vmul.f32 %v358, %v218
    %v375 = vmul.f32 %v373, %v219
    %v376 = vsel %vm150, %v374, 0.0
    %v377 = vsel %vm150, %v375, 0.0
    %v378 = vpack.c.bf16 %v376, %v376
    %v379 = vpack.c.bf16 %v377, %v377
    %380 = vst [vmem:[#allocation3] sm:$0xf] %v378
    %381 = vst [vmem:[#allocation3 + $0x4] sm:$0xf] %v379
    %v382 = vld [vmem:[#allocation6 + $0x8] sm:$0xf]
    %v383 = vld [vmem:[#allocation6 + $0xc] sm:$0xf]
    %v384 = vld [vmem:[#allocation2] sm:$0xf]
    %v385 = vld [vmem:[#allocation2 + $0x4] sm:$0xf]
    %v386 = vld [vmem:[#allocation2 + $0x8] sm:$0xf]
    %v387 = vld [vmem:[#allocation2 + $0xc] sm:$0xf]
    %v388 = vld [vmem:[#allocation2 + $0x10] sm:$0xf]
    %v389 = vld [vmem:[#allocation2 + $0x14] sm:$0xf]
    %v392 = vunpack.c.l.b16 %v382
    %v393 = vunpack.c.l.b16 %v383
    %v394 = vpack.c.b16 %v393, %v392
    %v401 = vunpack.c.l.b16 %v384
    %v402 = vunpack.c.l.b16 %v385
    %v403 = vunpack.c.l.b16 %v386
    %v404 = vunpack.c.l.b16 %v387
    %v405 = vunpack.c.l.b16 %v388
    %v406 = vunpack.c.l.b16 %v389
    %v407 = vpack.c.b16 %v402, %v401
    %v408 = vpack.c.b16 %v404, %v403
    %v409 = vpack.c.b16 %v406, %v405
    %vm413 = vcmask 392192
    %v415 = vsel %vm413, %v394, 0
    %417 = vmatpush.bf16.msra.mxu0 0
    %418 = vmatpush.bf16.msra.mxu0 0
    %419 = vmatpush.bf16.msra.mxu0 0
    %420 = vmatpush.bf16.msra.mxu0 0
    %421 = vmatpush.bf16.msra.mxu0 0
    %422 = vmatpush.bf16.msra.mxu0 %v409
    %423 = vmatpush.bf16.msra.mxu0 %v408
    %424 = vmatpush.bf16.msra.mxu0 %v407
    %425 = vmatmul.bf16.gmra.mxu0 %v415
    %v426 = vpop.f32.mrf.mxu0
    %v427 = vadd.f32 0.0, %v426
    %v428 = vpop.f32.mrf.mxu0
    %v429 = vadd.f32 0.0, %v428
    %430 = vdwg.mxu0
    %v431 = vld [vmem:[#allocation3] sm:$0xf]
    %v432 = vld [vmem:[#allocation3 + $0x4] sm:$0xf]
    %v433 = vld [vmem:[#allocation3 + $0x8] sm:$0xf]
    %v434 = vld [vmem:[#allocation3 + $0xc] sm:$0xf]
    %v435 = vld [vmem:[#allocation3 + $0x10] sm:$0xf]
    %v436 = vld [vmem:[#allocation3 + $0x14] sm:$0xf]
    %v443 = vunpack.c.l.b16 %v431
    %v444 = vunpack.c.l.b16 %v432
    %v445 = vunpack.c.l.b16 %v433
    %v446 = vunpack.c.l.b16 %v434
    %v447 = vunpack.c.l.b16 %v435
    %v448 = vunpack.c.l.b16 %v436
    %v449 = vpack.c.b16 %v444, %v443
    %v450 = vpack.c.b16 %v446, %v445
    %v451 = vpack.c.b16 %v448, %v447
    %455 = vmatpush.bf16.msra.mxu0 0
    %456 = vmatpush.bf16.msra.mxu0 0
    %457 = vmatpush.bf16.msra.mxu0 0
    %458 = vmatpush.bf16.msra.mxu0 0
    %459 = vmatpush.bf16.msra.mxu0 0
    %460 = vmatpush.bf16.msra.mxu0 %v451
    %461 = vmatpush.bf16.msra.mxu0 %v450
    %462 = vmatpush.bf16.msra.mxu0 %v449
    %463 = vmatmul.bf16.gmra.mxu0 %v415
    %v464 = vpop.f32.mrf.mxu0
    %v465 = vadd.f32 0.0, %v464
    %v466 = vpop.f32.mrf.mxu0
    %v467 = vadd.f32 0.0, %v466
    %468 = vdwg.mxu0
    %v469 = vpack.c.bf16 %v429, %v427
    %v470 = vld [vmem:[%s4] sm:$0xf]
    %v471 = vld [vmem:[%s4 + $0x4] sm:$0xf]
    %v472 = vld [vmem:[%s4 + $0x8] sm:$0xf]
    %v473 = vld [vmem:[%s4 + $0xc] sm:$0xf]
    %v474 = vld [vmem:[%s4 + $0x10] sm:$0xf]
    %v475 = vld [vmem:[%s4 + $0x14] sm:$0xf]
    %v476 = vld [vmem:[%s4 + $0x18] sm:$0xf]
    %v477 = vld [vmem:[%s4 + $0x1c] sm:$0xf]
    %v478 = vld [vmem:[%s4 + $0x20] sm:$0xf]
    %v479 = vld [vmem:[%s4 + $0x24] sm:$0xf]
    %v480 = vld [vmem:[%s4 + $0x28] sm:$0xf]
    %v481 = vld [vmem:[%s4 + $0x2c] sm:$0xf]
    %v482 = vld [vmem:[%s4 + $0x30] sm:$0xf]
    %v483 = vld [vmem:[%s4 + $0x34] sm:$0xf]
    %v484 = vld [vmem:[%s4 + $0x38] sm:$0xf]
    %v485 = vld [vmem:[%s4 + $0x3c] sm:$0xf]
    %v502 = vunpack.c.l.b16 %v470
    %v503 = vunpack.c.l.b16 %v471
    %v504 = vunpack.c.l.b16 %v472
    %v505 = vunpack.c.l.b16 %v473
    %v506 = vunpack.c.l.b16 %v474
    %v507 = vunpack.c.l.b16 %v475
    %v508 = vunpack.c.l.b16 %v476
    %v509 = vunpack.c.l.b16 %v477
    %v510 = vunpack.c.l.b16 %v478
    %v511 = vunpack.c.l.b16 %v479
    %v512 = vunpack.c.l.b16 %v480
    %v513 = vunpack.c.l.b16 %v481
    %v514 = vunpack.c.l.b16 %v482
    %v515 = vunpack.c.l.b16 %v483
    %v516 = vunpack.c.l.b16 %v484
    %v517 = vunpack.c.l.b16 %v485
    %v518 = vpack.c.b16 %v503, %v502
    %v519 = vpack.c.b16 %v505, %v504
    %v520 = vpack.c.b16 %v507, %v506
    %v521 = vpack.c.b16 %v509, %v508
    %v522 = vpack.c.b16 %v511, %v510
    %v523 = vpack.c.b16 %v513, %v512
    %v524 = vpack.c.b16 %v515, %v514
    %v525 = vpack.c.b16 %v517, %v516
    %534 = vmatpush.bf16.msra.mxu0 %v525
    %535 = vmatpush.bf16.msra.mxu0 %v524
    %536 = vmatpush.bf16.msra.mxu0 %v523
    %537 = vmatpush.bf16.msra.mxu0 %v522
    %538 = vmatpush.bf16.msra.mxu0 %v521
    %539 = vmatpush.bf16.msra.mxu0 %v520
    %540 = vmatpush.bf16.msra.mxu0 %v519
    %541 = vmatpush.bf16.msra.mxu0 %v518
    %542 = vmatmul.bf16.gmra.mxu0 %v469
    %v543 = vpop.f32.mrf.mxu0
    %v544 = vadd.f32 %v136, %v543
    %v545 = vpop.f32.mrf.mxu0
    %v546 = vadd.f32 %v136, %v545
    %547 = vdwg.mxu0
    %v548 = vxor.u32 %v544, 2147483648
    %v549 = vxor.u32 %v546, 2147483648
    %v550 = vmul.f32 %v548, 1.442695
    %v551 = vpow.pop %v550
    %v552 = vmul.f32 %v549, 1.442695
    %v553 = vpow.pop %v552
    %v554 = vadd.f32 %v551, 1.0
    %v555 = vadd.f32 %v553, 1.0
    %v556 = vrcp.pop %v554
    %v557 = vmul.f32 %v554, %v556
    %v558 = vsub.f32 1.0, %v557
    %v559 = vmul.f32 %v556, %v558
    %v560 = vadd.f32 %v556, %v559
    %vm561 = vweird.f32 %v554
    %vm562 = vweird.f32 %v556
    %vm563 = vmor %vm561, %vm562
    %v564 = vsel %vm563, %v556, %v560
    %v565 = vand.u32 2147483647, %v554
    %vm566 = vcmp.eq.f32.partialorder %v565, 8.507059e+37
    %v567 = vand.u32 %v554, 2147483648
    %v568 = vor.u32 1.1754944e-38, %v567
    %v569 = vsel %vm566, %v568, %v564
    %v570 = vmul.f32 1.0, %v569
    %v571 = vrcp.pop %v555
    %v572 = vmul.f32 %v555, %v571
    %v573 = vsub.f32 1.0, %v572
    %v574 = vmul.f32 %v571, %v573
    %v575 = vadd.f32 %v571, %v574
    %vm576 = vweird.f32 %v555
    %vm577 = vweird.f32 %v571
    %vm578 = vmor %vm576, %vm577
    %v579 = vsel %vm578, %v571, %v575
    %v580 = vand.u32 2147483647, %v555
    %vm581 = vcmp.eq.f32.partialorder %v580, 8.507059e+37
    %v582 = vand.u32 %v555, 2147483648
    %v583 = vor.u32 1.1754944e-38, %v582
    %v584 = vsel %vm581, %v583, %v579
    %v585 = vmul.f32 1.0, %v584
    %v586 = vtanh.pop %v544
    %v587 = vtanh.pop %v546
    %590 = vrot.lane.b32.xlu0 %v586, 64
    %v591 = vpop.permute.xlu0 %590
    %592 = vrot.lane.b32.xlu0 %v587, 64
    %v593 = vpop.permute.xlu0 %592
    %v596 = vmul.f32 %v570, %v591
    %v597 = vmul.f32 %v585, %v593
    %v598 = vadd.f32 %v596, %v465
    %v599 = vadd.f32 %v597, %v467
    %v600 = vtanh.pop %v598
    %v601 = vtanh.pop %v599
    %604 = vrot.lane.b32.xlu0 %v600, 32
    %v605 = vpop.permute.xlu0 %604
    %606 = vrot.lane.b32.xlu0 %v601, 32
    %v607 = vpop.permute.xlu0 %606
    %v610 = vmul.f32 %v570, %v605
    %v611 = vmul.f32 %v585, %v607
    %614 = vrot.lane.b32.xlu0 %v610, 96
    %v615 = vpop.permute.xlu0 %614
    %616 = vrot.lane.b32.xlu0 %v611, 96
    %v617 = vpop.permute.xlu0 %616
    %v620 = vsel %vm150, %v615, 0.0
    %v621 = vsel %vm150, %v617, 0.0
    %622 = vst [vmem:[#allocation14 + $0x10] sm:$0xff] %v620
    %623 = vst [vmem:[#allocation14 + $0x18] sm:$0xff] %v621
    %v624 = vpack.c.bf16 %v620, %v620
    %v625 = vpack.c.bf16 %v621, %v621
    %626 = vst [vmem:[#allocation2 + $0x8] sm:$0xf] %v624
    %627 = vst [vmem:[#allocation2 + $0xc] sm:$0xf] %v625
    %v628 = vld [vmem:[%s6] sm:$0xf]
    %v629 = vld [vmem:[%s6 + $0x4] sm:$0xf]
    %v630 = vld [vmem:[%s6 + $0x8] sm:$0xf]
    %v631 = vld [vmem:[%s6 + $0xc] sm:$0xf]
    %v632 = vld [vmem:[%s6 + $0x10] sm:$0xf]
    %v633 = vld [vmem:[%s6 + $0x14] sm:$0xf]
    %v634 = vld [vmem:[%s6 + $0x18] sm:$0xf]
    %v635 = vld [vmem:[%s6 + $0x1c] sm:$0xf]
    %v636 = vld [vmem:[%s6 + $0x20] sm:$0xf]
    %v637 = vld [vmem:[%s6 + $0x24] sm:$0xf]
    %v638 = vld [vmem:[%s6 + $0x28] sm:$0xf]
    %v639 = vld [vmem:[%s6 + $0x2c] sm:$0xf]
    %v640 = vld [vmem:[%s6 + $0x30] sm:$0xf]
    %v641 = vld [vmem:[%s6 + $0x34] sm:$0xf]
    %v642 = vld [vmem:[%s6 + $0x38] sm:$0xf]
    %v643 = vld [vmem:[%s6 + $0x3c] sm:$0xf]
    %v644 = vld [vmem:[%s7] sm:$0x1]
    %v646 = vperm.slane %v644, 0
    %v650 = vunpack.c.l.b16 %v624
    %v651 = vunpack.c.l.b16 %v625
    %v652 = vpack.c.b16 %v651, %v650
    %v670 = vunpack.c.l.b16 %v628
    %v671 = vunpack.c.l.b16 %v629
    %v672 = vunpack.c.l.b16 %v630
    %v673 = vunpack.c.l.b16 %v631
    %v674 = vunpack.c.l.b16 %v632
    %v675 = vunpack.c.l.b16 %v633
    %v676 = vunpack.c.l.b16 %v634
    %v677 = vunpack.c.l.b16 %v635
    %v678 = vunpack.c.l.b16 %v636
    %v679 = vunpack.c.l.b16 %v637
    %v680 = vunpack.c.l.b16 %v638
    %v681 = vunpack.c.l.b16 %v639
    %v682 = vunpack.c.l.b16 %v640
    %v683 = vunpack.c.l.b16 %v641
    %v684 = vunpack.c.l.b16 %v642
    %v685 = vunpack.c.l.b16 %v643
    %v686 = vpack.c.b16 %v671, %v670
    %v687 = vpack.c.b16 %v673, %v672
    %v688 = vpack.c.b16 %v675, %v674
    %v689 = vpack.c.b16 %v677, %v676
    %v690 = vpack.c.b16 %v679, %v678
    %v691 = vpack.c.b16 %v681, %v680
    %v692 = vpack.c.b16 %v683, %v682
    %v693 = vpack.c.b16 %v685, %v684
    %702 = vmatpush.bf16.msra.mxu0 %v693
    %703 = vmatpush.bf16.msra.mxu0 %v692
    %704 = vmatpush.bf16.msra.mxu0 %v691
    %705 = vmatpush.bf16.msra.mxu0 %v690
    %706 = vmatpush.bf16.msra.mxu0 %v689
    %707 = vmatpush.bf16.msra.mxu0 %v688
    %708 = vmatpush.bf16.msra.mxu0 %v687
    %709 = vmatpush.bf16.msra.mxu0 %v686
    %710 = vmatmul.bf16.gmra.mxu0 %v652
    %v711 = vpop.f32.mrf.mxu0
    %v712 = vadd.f32 %v646, %v711
    %v713 = vpop.f32.mrf.mxu0
    %v714 = vadd.f32 %v646, %v713
    %715 = vdwg.mxu0
    %v716 = vxor.u32 %v712, 2147483648
    %v717 = vxor.u32 %v714, 2147483648
    %v718 = vmul.f32 %v716, 1.442695
    %v719 = vpow.pop %v718
    %v720 = vmul.f32 %v717, 1.442695
    %v721 = vpow.pop %v720
    %v722 = vadd.f32 %v719, 1.0
    %v723 = vadd.f32 %v721, 1.0
    %v724 = vrcp.pop %v722
    %v725 = vmul.f32 %v722, %v724
    %v726 = vsub.f32 1.0, %v725
    %v727 = vmul.f32 %v724, %v726
    %v728 = vadd.f32 %v724, %v727
    %vm729 = vweird.f32 %v722
    %vm730 = vweird.f32 %v724
    %vm731 = vmor %vm729, %vm730
    %v732 = vsel %vm731, %v724, %v728
    %v733 = vand.u32 2147483647, %v722
    %vm734 = vcmp.eq.f32.partialorder %v733, 8.507059e+37
    %v735 = vand.u32 %v722, 2147483648
    %v736 = vor.u32 1.1754944e-38, %v735
    %v737 = vsel %vm734, %v736, %v732
    %v738 = vmul.f32 1.0, %v737
    %v739 = vrcp.pop %v723
    %v740 = vmul.f32 %v723, %v739
    %v741 = vsub.f32 1.0, %v740
    %v742 = vmul.f32 %v739, %v741
    %v743 = vadd.f32 %v739, %v742
    %vm744 = vweird.f32 %v723
    %vm745 = vweird.f32 %v739
    %vm746 = vmor %vm744, %vm745
    %v747 = vsel %vm746, %v739, %v743
    %v748 = vand.u32 2147483647, %v723
    %vm749 = vcmp.eq.f32.partialorder %v748, 8.507059e+37
    %v750 = vand.u32 %v723, 2147483648
    %v751 = vor.u32 1.1754944e-38, %v750
    %v752 = vsel %vm749, %v751, %v747
    %v753 = vmul.f32 1.0, %v752
    %v754 = vmul.f32 %v738, %v598
    %v755 = vmul.f32 %v753, %v599
    %v756 = vsel %vm150, %v754, 0.0
    %v757 = vsel %vm150, %v755, 0.0
    %v758 = vpack.c.bf16 %v756, %v756
    %v759 = vpack.c.bf16 %v757, %v757
    %760 = vst [vmem:[#allocation3 + $0x8] sm:$0xf] %v758
    %761 = vst [vmem:[#allocation3 + $0xc] sm:$0xf] %v759
    %v762 = vld [vmem:[#allocation6 + $0x10] sm:$0xf]
    %v763 = vld [vmem:[#allocation6 + $0x14] sm:$0xf]
    %v764 = vld [vmem:[#allocation2] sm:$0xf]
    %v765 = vld [vmem:[#allocation2 + $0x4] sm:$0xf]
    %v766 = vld [vmem:[#allocation2 + $0x8] sm:$0xf]
    %v767 = vld [vmem:[#allocation2 + $0xc] sm:$0xf]
    %v768 = vld [vmem:[#allocation2 + $0x10] sm:$0xf]
    %v769 = vld [vmem:[#allocation2 + $0x14] sm:$0xf]
    %v772 = vunpack.c.l.b16 %v762
    %v773 = vunpack.c.l.b16 %v763
    %v774 = vpack.c.b16 %v773, %v772
    %v781 = vunpack.c.l.b16 %v764
    %v782 = vunpack.c.l.b16 %v765
    %v783 = vunpack.c.l.b16 %v766
    %v784 = vunpack.c.l.b16 %v767
    %v785 = vunpack.c.l.b16 %v768
    %v786 = vunpack.c.l.b16 %v769
    %v787 = vpack.c.b16 %v782, %v781
    %v788 = vpack.c.b16 %v784, %v783
    %v789 = vpack.c.b16 %v786, %v785
    %v794 = vsel %vm413, %v774, 0
    %796 = vmatpush.bf16.msra.mxu0 0
    %797 = vmatpush.bf16.msra.mxu0 0
    %798 = vmatpush.bf16.msra.mxu0 0
    %799 = vmatpush.bf16.msra.mxu0 0
    %800 = vmatpush.bf16.msra.mxu0 0
    %801 = vmatpush.bf16.msra.mxu0 %v789
    %802 = vmatpush.bf16.msra.mxu0 %v788
    %803 = vmatpush.bf16.msra.mxu0 %v787
    %804 = vmatmul.bf16.gmra.mxu0 %v794
    %v805 = vpop.f32.mrf.mxu0
    %v806 = vadd.f32 0.0, %v805
    %v807 = vpop.f32.mrf.mxu0
    %v808 = vadd.f32 0.0, %v807
    %809 = vdwg.mxu0
    %v810 = vld [vmem:[#allocation3] sm:$0xf]
    %v811 = vld [vmem:[#allocation3 + $0x4] sm:$0xf]
    %v812 = vld [vmem:[#allocation3 + $0x8] sm:$0xf]
    %v813 = vld [vmem:[#allocation3 + $0xc] sm:$0xf]
    %v814 = vld [vmem:[#allocation3 + $0x10] sm:$0xf]
    %v815 = vld [vmem:[#allocation3 + $0x14] sm:$0xf]
    %v822 = vunpack.c.l.b16 %v810
    %v823 = vunpack.c.l.b16 %v811
    %v824 = vunpack.c.l.b16 %v812
    %v825 = vunpack.c.l.b16 %v813
    %v826 = vunpack.c.l.b16 %v814
    %v827 = vunpack.c.l.b16 %v815
    %v828 = vpack.c.b16 %v823, %v822
    %v829 = vpack.c.b16 %v825, %v824
    %v830 = vpack.c.b16 %v827, %v826
    %834 = vmatpush.bf16.msra.mxu0 0
    %835 = vmatpush.bf16.msra.mxu0 0
    %836 = vmatpush.bf16.msra.mxu0 0
    %837 = vmatpush.bf16.msra.mxu0 0
    %838 = vmatpush.bf16.msra.mxu0 0
    %839 = vmatpush.bf16.msra.mxu0 %v830
    %840 = vmatpush.bf16.msra.mxu0 %v829
    %841 = vmatpush.bf16.msra.mxu0 %v828
    %842 = vmatmul.bf16.gmra.mxu0 %v794
    %v843 = vpop.f32.mrf.mxu0
    %v844 = vadd.f32 0.0, %v843
    %v845 = vpop.f32.mrf.mxu0
    %v846 = vadd.f32 0.0, %v845
    %847 = vdwg.mxu0
    %v848 = vpack.c.bf16 %v808, %v806
    %v849 = vld [vmem:[%s4] sm:$0xf]
    %v850 = vld [vmem:[%s4 + $0x4] sm:$0xf]
    %v851 = vld [vmem:[%s4 + $0x8] sm:$0xf]
    %v852 = vld [vmem:[%s4 + $0xc] sm:$0xf]
    %v853 = vld [vmem:[%s4 + $0x10] sm:$0xf]
    %v854 = vld [vmem:[%s4 + $0x14] sm:$0xf]
    %v855 = vld [vmem:[%s4 + $0x18] sm:$0xf]
    %v856 = vld [vmem:[%s4 + $0x1c] sm:$0xf]
    %v857 = vld [vmem:[%s4 + $0x20] sm:$0xf]
    %v858 = vld [vmem:[%s4 + $0x24] sm:$0xf]
    %v859 = vld [vmem:[%s4 + $0x28] sm:$0xf]
    %v860 = vld [vmem:[%s4 + $0x2c] sm:$0xf]
    %v861 = vld [vmem:[%s4 + $0x30] sm:$0xf]
    %v862 = vld [vmem:[%s4 + $0x34] sm:$0xf]
    %v863 = vld [vmem:[%s4 + $0x38] sm:$0xf]
    %v864 = vld [vmem:[%s4 + $0x3c] sm:$0xf]
    %v881 = vunpack.c.l.b16 %v849
    %v882 = vunpack.c.l.b16 %v850
    %v883 = vunpack.c.l.b16 %v851
    %v884 = vunpack.c.l.b16 %v852
    %v885 = vunpack.c.l.b16 %v853
    %v886 = vunpack.c.l.b16 %v854
    %v887 = vunpack.c.l.b16 %v855
    %v888 = vunpack.c.l.b16 %v856
    %v889 = vunpack.c.l.b16 %v857
    %v890 = vunpack.c.l.b16 %v858
    %v891 = vunpack.c.l.b16 %v859
    %v892 = vunpack.c.l.b16 %v860
    %v893 = vunpack.c.l.b16 %v861
    %v894 = vunpack.c.l.b16 %v862
    %v895 = vunpack.c.l.b16 %v863
    %v896 = vunpack.c.l.b16 %v864
    %v897 = vpack.c.b16 %v882, %v881
    %v898 = vpack.c.b16 %v884, %v883
    %v899 = vpack.c.b16 %v886, %v885
    %v900 = vpack.c.b16 %v888, %v887
    %v901 = vpack.c.b16 %v890, %v889
    %v902 = vpack.c.b16 %v892, %v891
    %v903 = vpack.c.b16 %v894, %v893
    %v904 = vpack.c.b16 %v896, %v895
    %913 = vmatpush.bf16.msra.mxu0 %v904
    %914 = vmatpush.bf16.msra.mxu0 %v903
    %915 = vmatpush.bf16.msra.mxu0 %v902
    %916 = vmatpush.bf16.msra.mxu0 %v901
    %917 = vmatpush.bf16.msra.mxu0 %v900
    %918 = vmatpush.bf16.msra.mxu0 %v899
    %919 = vmatpush.bf16.msra.mxu0 %v898
    %920 = vmatpush.bf16.msra.mxu0 %v897
    %921 = vmatmul.bf16.gmra.mxu0 %v848
    %v922 = vpop.f32.mrf.mxu0
    %v923 = vadd.f32 %v136, %v922
    %v924 = vpop.f32.mrf.mxu0
    %v925 = vadd.f32 %v136, %v924
    %926 = vdwg.mxu0
    %v927 = vxor.u32 %v923, 2147483648
    %v928 = vxor.u32 %v925, 2147483648
    %v929 = vmul.f32 %v927, 1.442695
    %v930 = vpow.pop %v929
    %v931 = vmul.f32 %v928, 1.442695
    %v932 = vpow.pop %v931
    %v933 = vadd.f32 %v930, 1.0
    %v934 = vadd.f32 %v932, 1.0
    %v935 = vrcp.pop %v933
    %v936 = vmul.f32 %v933, %v935
    %v937 = vsub.f32 1.0, %v936
    %v938 = vmul.f32 %v935, %v937
    %v939 = vadd.f32 %v935, %v938
    %vm940 = vweird.f32 %v933
    %vm941 = vweird.f32 %v935
    %vm942 = vmor %vm940, %vm941
    %v943 = vsel %vm942, %v935, %v939
    %v944 = vand.u32 2147483647, %v933
    %vm945 = vcmp.eq.f32.partialorder %v944, 8.507059e+37
    %v946 = vand.u32 %v933, 2147483648
    %v947 = vor.u32 1.1754944e-38, %v946
    %v948 = vsel %vm945, %v947, %v943
    %v949 = vmul.f32 1.0, %v948
    %v950 = vrcp.pop %v934
    %v951 = vmul.f32 %v934, %v950
    %v952 = vsub.f32 1.0, %v951
    %v953 = vmul.f32 %v950, %v952
    %v954 = vadd.f32 %v950, %v953
    %vm955 = vweird.f32 %v934
    %vm956 = vweird.f32 %v950
    %vm957 = vmor %vm955, %vm956
    %v958 = vsel %vm957, %v950, %v954
    %v959 = vand.u32 2147483647, %v934
    %vm960 = vcmp.eq.f32.partialorder %v959, 8.507059e+37
    %v961 = vand.u32 %v934, 2147483648
    %v962 = vor.u32 1.1754944e-38, %v961
    %v963 = vsel %vm960, %v962, %v958
    %v964 = vmul.f32 1.0, %v963
    %v965 = vtanh.pop %v923
    %v966 = vtanh.pop %v925
    %969 = vrot.lane.b32.xlu0 %v965, 64
    %v970 = vpop.permute.xlu0 %969
    %971 = vrot.lane.b32.xlu0 %v966, 64
    %v972 = vpop.permute.xlu0 %971
    %v975 = vmul.f32 %v949, %v970
    %v976 = vmul.f32 %v964, %v972
    %v977 = vadd.f32 %v975, %v844
    %v978 = vadd.f32 %v976, %v846
    %v979 = vtanh.pop %v977
    %v980 = vtanh.pop %v978
    %983 = vrot.lane.b32.xlu0 %v979, 32
    %v984 = vpop.permute.xlu0 %983
    %985 = vrot.lane.b32.xlu0 %v980, 32
    %v986 = vpop.permute.xlu0 %985
    %v989 = vmul.f32 %v949, %v984
    %v990 = vmul.f32 %v964, %v986
    %993 = vrot.lane.b32.xlu0 %v989, 96
    %v994 = vpop.permute.xlu0 %993
    %995 = vrot.lane.b32.xlu0 %v990, 96
    %v996 = vpop.permute.xlu0 %995
    %v999 = vsel %vm150, %v994, 0.0
    %v1000 = vsel %vm150, %v996, 0.0
    %1001 = vst [vmem:[#allocation14 + $0x20] sm:$0xff] %v999
    %1002 = vst [vmem:[#allocation14 + $0x28] sm:$0xff] %v1000
    %v1003 = vpack.c.bf16 %v999, %v999
    %v1004 = vpack.c.bf16 %v1000, %v1000
    %1005 = vst [vmem:[#allocation2 + $0x10] sm:$0xf] %v1003
    %1006 = vst [vmem:[#allocation2 + $0x14] sm:$0xf] %v1004
    %s1007 = sld [smem:[#allocation5]]
    %s1008 = scalar_lea.vmem [#allocation14], %s1007
    %v1009 = vld [vmem:[%s1008] sm:$0x1]
    %s1010 = sld [smem:[#allocation5 + $0x1]]
    %s1011 = scalar_lea.vmem [#allocation14], %s1010
    %v1012 = vld [vmem:[%s1011] sm:$0x1]
    %s1013 = sld [smem:[#allocation5 + $0x2]]
    %s1014 = scalar_lea.vmem [#allocation14], %s1013
    %v1015 = vld [vmem:[%s1014] sm:$0x1]
    %s1016 = sld [smem:[#allocation5 + $0x3]]
    %s1017 = scalar_lea.vmem [#allocation14], %s1016
    %v1018 = vld [vmem:[%s1017] sm:$0x1]
    %s1019 = sld [smem:[#allocation5 + $0x4]]
    %s1020 = scalar_lea.vmem [#allocation14], %s1019
    %v1021 = vld [vmem:[%s1020] sm:$0x1]
    %s1022 = sld [smem:[#allocation5 + $0x5]]
    %s1023 = scalar_lea.vmem [#allocation14], %s1022
    %v1024 = vld [vmem:[%s1023] sm:$0x1]
    %s1025 = sld [smem:[#allocation5 + $0x6]]
    %s1026 = scalar_lea.vmem [#allocation14], %s1025
    %v1027 = vld [vmem:[%s1026] sm:$0x1]
    %s1028 = sld [smem:[#allocation5 + $0x7]]
    %s1029 = scalar_lea.vmem [#allocation14], %s1028
    %v1030 = vld [vmem:[%s1029] sm:$0x1]
    %v1032 = vrot.slane %v1012, 7
    %v1035 = vrot.slane %v1015, 6
    %v1038 = vrot.slane %v1018, 5
    %v1041 = vrot.slane %v1021, 4
    %v1044 = vrot.slane %v1024, 3
    %v1047 = vrot.slane %v1027, 2
    %v1050 = vrot.slane %v1030, 1
    %vm1052 = vcmask 1040384
    %v1053 = vsel %vm1052, %v1009, %v1032
    %vm1054 = vcmask 1041408
    %v1055 = vsel %vm1054, %v1053, %v1035
    %vm1056 = vcmask 1042432
    %v1057 = vsel %vm1056, %v1055, %v1038
    %vm1058 = vcmask 1043456
    %v1059 = vsel %vm1058, %v1057, %v1041
    %vm1060 = vcmask 1044480
    %v1061 = vsel %vm1060, %v1059, %v1044
    %vm1062 = vcmask 1045504
    %v1063 = vsel %vm1062, %v1061, %v1047
    %vm1064 = vcmask 1046528
    %v1065 = vsel %vm1064, %v1063, %v1050
    %v1066 = vpack.c.bf16 %v1065, %v1065
    %v1067 = vld [vmem:[#allocation11] sm:$0xf]
    %v1068 = vld [vmem:[#allocation11 + $0x4] sm:$0xf]
    %v1069 = vld [vmem:[#allocation11 + $0x8] sm:$0xf]
    %v1070 = vld [vmem:[#allocation11 + $0xc] sm:$0xf]
    %v1071 = vld [vmem:[#allocation11 + $0x10] sm:$0xf]
    %v1072 = vld [vmem:[#allocation11 + $0x14] sm:$0xf]
    %v1073 = vld [vmem:[#allocation11 + $0x18] sm:$0xf]
    %v1074 = vld [vmem:[#allocation11 + $0x1c] sm:$0xf]
    %v1075 = vld [vmem:[#allocation11 + $0x20] sm:$0xf]
    %v1076 = vld [vmem:[#allocation11 + $0x24] sm:$0xf]
    %v1077 = vld [vmem:[#allocation11 + $0x28] sm:$0xf]
    %v1078 = vld [vmem:[#allocation11 + $0x2c] sm:$0xf]
    %v1079 = vld [vmem:[#allocation11 + $0x30] sm:$0xf]
    %v1080 = vld [vmem:[#allocation11 + $0x34] sm:$0xf]
    %v1081 = vld [vmem:[#allocation11 + $0x38] sm:$0xf]
    %v1082 = vld [vmem:[#allocation11 + $0x3c] sm:$0xf]
    %v1083 = vld [vmem:[%s9] sm:$0x1]
    %v1085 = vperm.slane %v1083, 0
    %v1103 = vunpack.c.l.b16 %v1067
    %v1104 = vunpack.c.l.b16 %v1068
    %v1105 = vunpack.c.l.b16 %v1069
    %v1106 = vunpack.c.l.b16 %v1070
    %v1107 = vunpack.c.l.b16 %v1071
    %v1108 = vunpack.c.l.b16 %v1072
    %v1109 = vunpack.c.l.b16 %v1073
    %v1110 = vunpack.c.l.b16 %v1074
    %v1111 = vunpack.c.l.b16 %v1075
    %v1112 = vunpack.c.l.b16 %v1076
    %v1113 = vunpack.c.l.b16 %v1077
    %v1114 = vunpack.c.l.b16 %v1078
    %v1115 = vunpack.c.l.b16 %v1079
    %v1116 = vunpack.c.l.b16 %v1080
    %v1117 = vunpack.c.l.b16 %v1081
    %v1118 = vunpack.c.l.b16 %v1082
    %v1119 = vpack.c.b16 %v1104, %v1103
    %v1120 = vpack.c.b16 %v1106, %v1105
    %v1121 = vpack.c.b16 %v1108, %v1107
    %v1122 = vpack.c.b16 %v1110, %v1109
    %v1123 = vpack.c.b16 %v1112, %v1111
    %v1124 = vpack.c.b16 %v1114, %v1113
    %v1125 = vpack.c.b16 %v1116, %v1115
    %v1126 = vpack.c.b16 %v1118, %v1117
    %1135 = vmatpush.bf16.msra.mxu0 %v1126
    %1136 = vmatpush.bf16.msra.mxu0 %v1125
    %1137 = vmatpush.bf16.msra.mxu0 %v1124
    %1138 = vmatpush.bf16.msra.mxu0 %v1123
    %1139 = vmatpush.bf16.msra.mxu0 %v1122
    %1140 = vmatpush.bf16.msra.mxu0 %v1121
    %1141 = vmatpush.bf16.msra.mxu0 %v1120
    %1142 = vmatpush.bf16.msra.mxu0 %v1119
    %1143 = vmatmul.bf16.gmra.mxu0 %v1066
    %v1144 = vpop.f32.mrf.mxu0
    %v1145 = vadd.f32 %v1085, %v1144
    %v1146 = vpop.f32.mrf.mxu0
    %1147 = vdwg.mxu0
    %v1148 = vtanh.pop %v1145
    %v1149 = vpack.c.bf16 %v1148, %v1148
    %v1150 = vld [vmem:[#allocation12] sm:$0xf]
    %v1151 = vld [vmem:[#allocation12 + $0x4] sm:$0xf]
    %v1152 = vld [vmem:[#allocation12 + $0x8] sm:$0xf]
    %v1153 = vld [vmem:[#allocation12 + $0xc] sm:$0xf]
    %v1154 = vld [vmem:[#allocation12 + $0x10] sm:$0xf]
    %v1155 = vld [vmem:[#allocation12 + $0x14] sm:$0xf]
    %v1156 = vld [vmem:[#allocation12 + $0x18] sm:$0xf]
    %v1157 = vld [vmem:[#allocation12 + $0x1c] sm:$0xf]
    %v1158 = vld [vmem:[#allocation12 + $0x20] sm:$0xf]
    %v1159 = vld [vmem:[#allocation12 + $0x24] sm:$0xf]
    %v1160 = vld [vmem:[#allocation12 + $0x28] sm:$0xf]
    %v1161 = vld [vmem:[#allocation12 + $0x2c] sm:$0xf]
    %v1162 = vld [vmem:[#allocation12 + $0x30] sm:$0xf]
    %v1163 = vld [vmem:[#allocation12 + $0x34] sm:$0xf]
    %v1164 = vld [vmem:[#allocation12 + $0x38] sm:$0xf]
    %v1165 = vld [vmem:[#allocation12 + $0x3c] sm:$0xf]
    %v1166 = vld [vmem:[%s11] sm:$0x1]
    %v1168 = vperm.slane %v1166, 0
    %v1186 = vunpack.c.l.b16 %v1150
    %v1187 = vunpack.c.l.b16 %v1151
    %v1188 = vunpack.c.l.b16 %v1152
    %v1189 = vunpack.c.l.b16 %v1153
    %v1190 = vunpack.c.l.b16 %v1154
    %v1191 = vunpack.c.l.b16 %v1155
    %v1192 = vunpack.c.l.b16 %v1156
    %v1193 = vunpack.c.l.b16 %v1157
    %v1194 = vunpack.c.l.b16 %v1158
    %v1195 = vunpack.c.l.b16 %v1159
    %v1196 = vunpack.c.l.b16 %v1160
    %v1197 = vunpack.c.l.b16 %v1161
    %v1198 = vunpack.c.l.b16 %v1162
    %v1199 = vunpack.c.l.b16 %v1163
    %v1200 = vunpack.c.l.b16 %v1164
    %v1201 = vunpack.c.l.b16 %v1165
    %v1202 = vpack.c.b16 %v1187, %v1186
    %v1203 = vpack.c.b16 %v1189, %v1188
    %v1204 = vpack.c.b16 %v1191, %v1190
    %v1205 = vpack.c.b16 %v1193, %v1192
    %v1206 = vpack.c.b16 %v1195, %v1194
    %v1207 = vpack.c.b16 %v1197, %v1196
    %v1208 = vpack.c.b16 %v1199, %v1198
    %v1209 = vpack.c.b16 %v1201, %v1200
    %1218 = vmatpush.bf16.msra.mxu0 %v1209
    %1219 = vmatpush.bf16.msra.mxu0 %v1208
    %1220 = vmatpush.bf16.msra.mxu0 %v1207
    %1221 = vmatpush.bf16.msra.mxu0 %v1206
    %1222 = vmatpush.bf16.msra.mxu0 %v1205
    %1223 = vmatpush.bf16.msra.mxu0 %v1204
    %1224 = vmatpush.bf16.msra.mxu0 %v1203
    %1225 = vmatpush.bf16.msra.mxu0 %v1202
    %1226 = vmatmul.bf16.gmra.mxu0 %v1149
    %v1227 = vpop.f32.mrf.mxu0
    %v1228 = vadd.f32 %v1168, %v1227
    %v1229 = vpop.f32.mrf.mxu0
    %1230 = vdwg.mxu0
    %1231 = vst [vmem:[#allocation15] sm:$0xff] %v1228
    // Predicated region
    $region62: #{tpu_custom_call.1} parent=1 // pred_check
      _
    $region63: #{tpu_custom_call.1} parent=1 // pred_check_branch
      %1233 = sbr.rel (0) target = $region65
    $region64: #{tpu_custom_call.1} parent=1 // pred_region
      %1235 = vsyncadd [#allocation8], 0
      %s1236 = sshll.u32 [#allocation14], 4
      %s1237 = int_to_ptr.vmem [resolvable:$true] %s1236
      %s1238 = sshll.u32 %s12, 4
      %s1239 = int_to_ptr.hbm [resolvable:$true] %s1238
      %1244 = dma.vmem_to_hbm [thread:$0]  %s1237, 768, %s1239, [#allocation8], 128, 128, 8
    $region65: #{tpu_custom_call.1} parent=1 // pred_fallthru
      _
    // Predicated region
    $region66: #{tpu_custom_call.1} parent=1 // pred_check
      _
    $region67: #{tpu_custom_call.1} parent=1 // pred_check_branch
      %1246 = sbr.rel (0) target = $region69
    $region68: #{tpu_custom_call.1} parent=1 // pred_region
      %1248 = vsyncadd [#allocation16], 0
      %s1250 = sshll.u32 [#allocation15], 4
      %s1251 = int_to_ptr.vmem [resolvable:$true] %s1250
      %s1252 = sshll.u32 %s13, 4
      %s1253 = int_to_ptr.hbm [resolvable:$true] %s1252
      %1255 = dma.vmem_to_hbm [thread:$0]  %s1251, 128, %s1253, [#allocation16]
    $region69: #{tpu_custom_call.1} parent=1 // pred_fallthru
      _
    // Predicated region
    $region70: #{tpu_custom_call.1} parent=1 // pred_check
      _
    $region71: #{tpu_custom_call.1} parent=1 // pred_check_branch
      %1257 = sbr.rel (0) target = $region73
    $region72: #{tpu_custom_call.1} parent=1 // pred_region
      %1259 = dma.done [#allocation8], 768
    $region73: #{tpu_custom_call.1} parent=1 // pred_fallthru
      _
    // Predicated region
    $region74: #{tpu_custom_call.1} parent=1 // pred_check
      _
    $region75: #{tpu_custom_call.1} parent=1 // pred_check_branch
      %1261 = sbr.rel (0) target = $region77
    $region76: #{tpu_custom_call.1} parent=1 // pred_region
      %1263 = dma.done [#allocation16], 128
    $region77: #{tpu_custom_call.1} parent=1 // pred_fallthru
      _
    %1264 = vsyncpa [#allocation7], 1
    %1265 = vsyncpa [#allocation10], 1
    %1266 = vsyncpa [#allocation13], 1
    %1267 = vsyncpa [#allocation8], 1
    %1268 = vsyncpa [#allocation16], 1

</llo_original>
